<compile_context>
chip_gen: v5e
topology: v5e:2x2
jax: 0.10.0
libtpu: 0.0.40
codegen_flags: <defaults>
</compile_context>

<pallas_src>
import functools
import math

import jax
import jax.numpy as jnp
from jax.experimental import pallas as pl
from jax.experimental.pallas import tpu as pltpu


def _recip(x):
    """Newton-refined EUP reciprocal (~f32 accuracy, no per-element divide)."""
    inv = pl.reciprocal(x, approx=True)
    return inv * (2.0 - x * inv)


def _atan_nonneg(x):
    # float32-accurate arctan for x >= 0 (Cephes atanf range reduction + odd poly).
    # TODO(synk): replace with jnp.arctan once lax.atan lowering is guaranteed in Mosaic.
    tan3pio8 = 2.414213562373095
    tanpio8 = 0.4142135623730951
    big = x > tan3pio8
    mid = (x > tanpio8) & jnp.logical_not(big)
    y0 = jnp.where(big, jnp.float32(math.pi / 2.0),
                   jnp.where(mid, jnp.float32(math.pi / 4.0), jnp.float32(0.0)))
    safe = jnp.maximum(x, jnp.float32(1e-30))
    xr = jnp.where(big, -_recip(safe),
                   jnp.where(mid, (x - 1.0) * _recip(x + 1.0), x))
    z = xr * xr
    poly = ((((8.05374449538e-2 * z - 1.38776856032e-1) * z
              + 1.99777106478e-1) * z - 3.33329491539e-1) * z) * xr + xr
    return y0 + poly


def oft_kernel(params_ref, corners_ref, feat_ref, out_ref, xd_s, yd_s, *,
               img_h, img_w, c_chan, nsub, tile_c, inv_scale):
    b = pl.program_id(0)
    i = pl.program_id(2)

    # Output block is resident across the (innermost) camera axis: running max.
    @pl.when(i == 0)
    def _init():
        out_ref[...] = jnp.full(out_ref.shape, -jnp.inf, out_ref.dtype)

    keep = params_ref[b, i, 29]

    @pl.when(keep > 0.5)
    def _body():
        # ---- per-camera scalars: read once from SMEM, up front ----
        cal = [params_ref[b, i, j] for j in range(12)]      # flattened K @ imu2c
        fx = params_ref[b, i, 12]
        fy = params_ref[b, i, 13]
        cx = params_ref[b, i, 14]
        cy = params_ref[b, i, 15]
        k1 = params_ref[b, i, 16]
        k2 = params_ref[b, i, 17]
        k3 = params_ref[b, i, 18]
        p1 = params_ref[b, i, 19]
        p2c = params_ref[b, i, 20]
        k4 = params_ref[b, i, 21]
        fish = params_ref[b, i, 22]
        r00 = params_ref[b, i, 23]
        r01 = params_ref[b, i, 24]
        r10 = params_ref[b, i, 25]
        r11 = params_ref[b, i, 26]
        t0 = params_ref[b, i, 27]
        t1 = params_ref[b, i, 28]
        inv_fx = 1.0 / fx           # scalar divides: once per camera, not per voxel
        inv_fy = 1.0 / fy

        # ---- dense (nsub, tile_c) voxel corner coordinates ----
        X = corners_ref[0, 0, 0:nsub, :]
        Y = corners_ref[0, 0, nsub:2 * nsub, :]
        Z = corners_ref[0, 0, 2 * nsub:3 * nsub, :]

        # ---- perspective projection (guarded reciprocal of h2) ----
        h0 = cal[0] * X + cal[1] * Y + cal[2] * Z + cal[3]
        h1 = cal[4] * X + cal[5] * Y + cal[6] * Z + cal[7]
        h2 = cal[8] * X + cal[9] * Y + cal[10] * Z + cal[11]
        bm = (h2 > 0.0).astype(jnp.float32)                  # behind-camera flag
        inv_h2 = _recip(jnp.where(h2 > 0.0, h2, 1.0))
        u = h0 * bm * inv_h2
        v = h1 * bm * inv_h2

        xn = (u - cx) * inv_fx
        yn = (v - cy) * inv_fy
        r2 = xn * xn + yn * yn

        # ---- distortion: only the relevant model runs (per-camera branch) ----
        @pl.when(fish > 0.5)
        def _fisheye():
            r = jnp.sqrt(r2)
            theta = _atan_nonneg(r)
            t2 = theta * theta
            rad = theta * (1.0 + k1 * t2 + k2 * t2 * t2 + k3 * t2 * t2 * t2
                           + k4 * t2 * t2 * t2 * t2) * _recip(jnp.maximum(r, 1e-20))
            xd_s[...] = xn * rad
            yd_s[...] = yn * rad

        @pl.when(fish <= 0.5)
        def _pinhole():
            radial = 1.0 + k1 * r2 + k2 * r2 * r2 + k3 * r2 * r2 * r2
            xd_s[...] = xn * radial + (2.0 * p1 * xn * yn + p2c * (r2 + 2.0 * xn * xn))
            yd_s[...] = yn * radial + (p1 * (r2 + 2.0 * yn * yn) + 2.0 * p2c * xn * yn)

        xd = (xd_s[...] * fx + cx) * bm
        yd = (yd_s[...] * fy + cy) * bm

        # ---- post rotation / translation, scale, integer pixel coords ----
        nu = (r00 * xd + r01 * yd + t0) * inv_scale
        nv = (r10 * xd + r11 * yd + t1) * inv_scale
        ix = nu.astype(jnp.int32)            # trunc-toward-zero == torch .long()
        iy = nv.astype(jnp.int32)
        vis = (ix > 0) & (ix < img_w) & (iy > 0) & (iy < img_h)   # torch bounds (>0)
        colidx = jnp.where(vis, ix, jnp.int32(-1))  # invisible -> no one-hot match

        # ---- two-stage gather: MXU column select, VPU row select ----
        feat = feat_ref[0, 0]                        # (C*Himg, Wimg) bf16
        iota_w = jax.lax.broadcasted_iota(jnp.int32, (img_w, tile_c), 0)
        iota_h = jax.lax.broadcasted_iota(jnp.int32, (img_h, tile_c), 0)

        for s in range(nsub):                        # static, nsub <= 8
            col_oh = (iota_w == colidx[s][None, :]).astype(jnp.bfloat16)
            g1 = jnp.dot(feat, col_oh, preferred_element_type=jnp.float32)
            row_m = (iota_h == iy[s][None, :]).astype(jnp.float32)
            g = jnp.sum(g1.reshape(c_chan, img_h, tile_c) * row_m[None, :, :],
                        axis=1)                      # (C, tile_c)
            lo = s * tile_c
            hi = lo + tile_c
            out_ref[0, :, lo:hi] = jnp.maximum(out_ref[0, :, lo:hi], g)


def _round_up(x, m):
    return (x + m - 1) // m * m


def oftv3_forward(features, ks, imu2cs, post_rots, post_trans, undists, grid,
                  drop_idx, neck, grid_res, grid_height, scale=1.0):
    B, I, C, Himg, Wimg = features.shape

    # ---- z_corners: [0, 0, h] offsets, matching the torch buffer ----
    y_vals = (-jnp.arange(0.0, grid_height, grid_res[2], dtype=jnp.float32)
              + grid_height / 2.0)
    n_corner = int(y_vals.shape[0])
    Hc = n_corner - 1
    z_corners = jnp.concatenate(
        [jnp.zeros((Hc, 2), jnp.float32), y_vals[:Hc, None]], axis=1)   # (Hc, 3)

    g = grid[:, :-1, :-1, :].astype(jnp.float32)                        # (B, D, W, 3)
    Dd, Ww = int(g.shape[1]), int(g.shape[2])
    corners = g[:, None] + z_corners[None, :, None, None, :]            # (B, Hc, D, W, 3)
    Nvox = Hc * Dd * Ww

    # ---- voxel tiling: TILE_N = NSUB * TILE_C, lane-dense, host-padded ----
    TILE_C = 128
    NSUB = max(1, min(8, _round_up(Nvox, TILE_C) // TILE_C))
    TILE_N = NSUB * TILE_C
    Ntiles = -(-Nvox // TILE_N)
    Nvox_pad = Ntiles * TILE_N

    corners_flat = corners.reshape(B, Nvox, 3).transpose(0, 2, 1)       # (B, 3, Nvox)
    corners_flat = jnp.pad(corners_flat, ((0, 0), (0, 0), (0, Nvox_pad - Nvox)))
    # (B, Ntiles, 3*NSUB, TILE_C): rows [0,NSUB)=X, [NSUB,2N)=Y, [2N,3N)=Z;
    # within-tile voxel index = sublane*TILE_C + lane (dense math layout).
    corners_dense = (corners_flat
                     .reshape(B, 3, Ntiles, NSUB, TILE_C)
                     .transpose(0, 2, 1, 3, 4)
                     .reshape(B, Ntiles, 3 * NSUB, TILE_C))

    # ---- per-camera scalar parameter table (SMEM) ----
    calib = jnp.einsum("bnij,bnjk->bnik", ks, imu2cs)                    # (B, I, 3, 4)
    fx = ks[..., 0, 0]
    fy = ks[..., 1, 1]
    cx = ks[..., 0, 2]
    cy = ks[..., 1, 2]
    keep = jnp.array([0.0 if i in drop_idx else 1.0 for i in range(I)], jnp.float32)
    keep = jnp.broadcast_to(keep[None, :], (B, I))
    params = jnp.concatenate([
        calib.reshape(B, I, 12),
        fx[..., None], fy[..., None], cx[..., None], cy[..., None],
        undists[..., :6],
        undists[..., 6:7],
        post_rots[..., 0, 0, None], post_rots[..., 0, 1, None],
        post_rots[..., 1, 0, None], post_rots[..., 1, 1, None],
        post_trans[..., 0, None], post_trans[..., 1, None],
        keep[..., None],
        jnp.zeros((B, I, 2), jnp.float32),
    ], axis=-1).astype(jnp.float32)                                      # (B, I, 32)

    # Features: (C, Himg, Wimg) -> (C*Himg, Wimg) slab, bf16 for the MXU gather.
    # TODO(synk): bf16 rounds feature values; keep f32 here if exact feature
    #             precision is required (costs ~3x on the MXU).
    feat2 = features.reshape(B, I, C * Himg, Wimg).astype(jnp.bfloat16)

    out = pl.pallas_call(
        functools.partial(oft_kernel, img_h=Himg, img_w=Wimg, c_chan=C,
                          nsub=NSUB, tile_c=TILE_C, inv_scale=1.0 / float(scale)),
        out_shape=jax.ShapeDtypeStruct((B, C, Nvox_pad), jnp.float32),
        grid=(B, Ntiles, I),
        in_specs=[
            pl.BlockSpec(memory_space=pltpu.MemorySpace.SMEM),                    # params
            pl.BlockSpec((1, 1, 3 * NSUB, TILE_C), lambda b, n, i: (b, n, 0, 0)),  # corners
            pl.BlockSpec((1, 1, C * Himg, Wimg), lambda b, n, i: (b, i, 0, 0)),    # features
        ],
        out_specs=pl.BlockSpec((1, C, TILE_N), lambda b, n, i: (b, 0, n)),
        scratch_shapes=[pltpu.VMEM((NSUB, TILE_C), jnp.float32),   # xd (branch result)
                        pltpu.VMEM((NSUB, TILE_C), jnp.float32)],  # yd (branch result)
        compiler_params=pltpu.CompilerParams(
            dimension_semantics=("parallel", "parallel", "arbitrary"),
            vmem_limit_bytes=48 * 1024 * 1024),
    )(params, corners_dense, feat2)

    vox = out[:, :, :Nvox].reshape(B, C, Hc, Dd, Ww)
    if neck == "3d":
        return vox.transpose(0, 1, 3, 4, 2)          # (B, C, D, W, Hc)
    # TODO(synk): add_coord=True path (pure concat/reshape glue) not implemented.
    return vox.reshape(B, C * Hc, Dd, Ww)


if __name__ == "__main__":
    key = jax.random.PRNGKey(0)
    B, I, C, Himg, Wimg = 2, 2, 4, 16, 16
    Dd, Ww = 8, 8
    grid_res = (0.5, 0.5, 0.5)
    grid_height = 2.5            # -> Hc = 4 height channels
    scale = 1.0

    kf, kg = jax.random.split(key, 2)
    features = jax.random.normal(kf, (B, I, C, Himg, Wimg), dtype=jnp.float32)

    xs = jnp.linspace(-4.0, 4.0, Dd + 1)
    ys = jnp.linspace(-4.0, 4.0, Ww + 1)
    gx, gy = jnp.meshgrid(xs, ys, indexing="ij")
    base = jnp.stack([gx, gy, jnp.zeros_like(gx)], axis=-1)          # (D+1, W+1, 3)
    grid = (jnp.broadcast_to(base, (B, Dd + 1, Ww + 1, 3))
            + 0.01 * jax.random.normal(kg, (B, Dd + 1, Ww + 1, 3))).astype(jnp.float32)

    k_single = jnp.array([[10.0, 0.0, 8.0],
                          [0.0, 10.0, 8.0],
                          [0.0, 0.0, 1.0]], jnp.float32)
    ks = jnp.broadcast_to(k_single, (B, I, 3, 3))

    imu2cs = jnp.stack([
        jnp.stack([
            jnp.array([[1.0, 0.0, 0.0, 0.1],
                       [0.0, 0.0, -1.0, 0.2],
                       [0.0, 1.0, 0.0, 3.0 + 0.5 * img]], jnp.float32)
            for img in range(I)], axis=0)
        for _ in range(B)], axis=0)                                   # (B, I, 3, 4)

    post_rots = jnp.broadcast_to(jnp.eye(3, dtype=jnp.float32), (B, I, 3, 3))
    post_trans = jnp.broadcast_to(jnp.array([0.5, -0.3, 0.0], jnp.float32), (B, I, 3))

    und_pinhole = jnp.array([0.01, 0.001, 0.0001, 0.001, 0.001, 0.0002, 0.0], jnp.float32)
    und_fisheye = jnp.array([0.01, 0.001, 0.0001, 0.0, 0.0, 0.0002, 1.0], jnp.float32)
    undists = jnp.broadcast_to(jnp.stack([und_pinhole, und_fisheye], 0), (B, I, 7))

    drop_idx = []
    neck = "2d"

    out = oftv3_forward(features, ks, imu2cs, post_rots, post_trans, undists, grid,
                        drop_idx, neck, grid_res, grid_height, scale=scale)
    jax.block_until_ready(out)
    assert out.shape == (B, C * 4, Dd, Ww), out.shape
    assert jnp.isfinite(out).all()
    print("KERNEL_OK")
</pallas_src>

<mosaic_0001>
module attributes {stable_mosaic.version = 11 : i64} {
  func.func @oft_kernel(%arg0: i32, %arg1: i32, %arg2: i32, %arg3: memref<2x2x32xf32, #tpu.memory_space<smem>>, %arg4: memref<1x1x6x128xf32, #tpu.memory_space<vmem>>, %arg5: memref<1x1x64x16xbf16, #tpu.memory_space<vmem>>, %arg6: memref<1x4x256xf32, #tpu.memory_space<vmem>>, %arg7: memref<2x128xf32, #tpu.memory_space<vmem>>, %arg8: memref<2x128xf32, #tpu.memory_space<vmem>>) attributes {dimension_semantics = [#tpu.dimension_semantics<parallel>, #tpu.dimension_semantics<parallel>, #tpu.dimension_semantics<arbitrary>], iteration_bounds = array<i64: 2, 1, 2>, scalar_prefetch = 0 : i64, scratch_operands = 2 : i64, tpu.core_type = #tpu.core_type<tc>, window_params = [{transform_indices = @transform_0, window_bounds = array<i64: 2, 2, 32>}, {transform_indices = @transform_1, window_bounds = array<i64: 1, 1, 6, 128>}, {transform_indices = @transform_2, window_bounds = array<i64: 1, 1, 64, 16>}, {transform_indices = @transform_3, window_bounds = array<i64: 1, 4, 256>}]} {
    %c0_i32 = arith.constant 0 : i32
    %0 = arith.cmpi eq, %arg2, %c0_i32 : i32
    %1 = arith.extui %0 : i1 to i32
    %c0_i32_0 = arith.constant 0 : i32
    %2 = arith.cmpi ne, %1, %c0_i32_0 : i32
    scf.if %2 {
      %cst_2 = arith.constant 0xFF800000 : f32
      %9 = vector.broadcast %cst_2 : f32 to vector<1x4x256xf32>
      %c0 = arith.constant 0 : index
      %c0_3 = arith.constant 0 : index
      %c0_4 = arith.constant 0 : index
      %10 = vector.load %arg6[%c0, %c0_3, %c0_4] : memref<1x4x256xf32, #tpu.memory_space<vmem>>, vector<1x4x256xf32>
      tpu.vector_store %arg6[%c0, %c0_3, %c0_4], %9 {strides = array<i32>} : memref<1x4x256xf32, #tpu.memory_space<vmem>>, vector<1x4x256xf32>,
    } else {
    }
    %3 = arith.index_cast %arg0 : i32 to index
    %4 = arith.index_cast %arg2 : i32 to index
    %c29 = arith.constant 29 : index
    %5 = memref.load %arg3[%3, %4, %c29] : memref<2x2x32xf32, #tpu.memory_space<smem>>
    %cst = arith.constant 5.000000e-01 : f32
    %6 = arith.cmpf ogt, %5, %cst : f32
    %7 = arith.extui %6 : i1 to i32
    %c0_i32_1 = arith.constant 0 : i32
    %8 = arith.cmpi ne, %7, %c0_i32_1 : i32
    scf.if %8 {
      %9 = arith.index_cast %arg0 : i32 to index
      %10 = arith.index_cast %arg2 : i32 to index
      %c0 = arith.constant 0 : index
      %11 = memref.load %arg3[%9, %10, %c0] : memref<2x2x32xf32, #tpu.memory_space<smem>>
      %12 = arith.index_cast %arg0 : i32 to index
      %13 = arith.index_cast %arg2 : i32 to index
      %c1 = arith.constant 1 : index
      %14 = memref.load %arg3[%12, %13, %c1] : memref<2x2x32xf32, #tpu.memory_space<smem>>
      %15 = arith.index_cast %arg0 : i32 to index
      %16 = arith.index_cast %arg2 : i32 to index
      %c2 = arith.constant 2 : index
      %17 = memref.load %arg3[%15, %16, %c2] : memref<2x2x32xf32, #tpu.memory_space<smem>>
      %18 = arith.index_cast %arg0 : i32 to index
      %19 = arith.index_cast %arg2 : i32 to index
      %c3 = arith.constant 3 : index
      %20 = memref.load %arg3[%18, %19, %c3] : memref<2x2x32xf32, #tpu.memory_space<smem>>
      %21 = arith.index_cast %arg0 : i32 to index
      %22 = arith.index_cast %arg2 : i32 to index
      %c4 = arith.constant 4 : index
      %23 = memref.load %arg3[%21, %22, %c4] : memref<2x2x32xf32, #tpu.memory_space<smem>>
      %24 = arith.index_cast %arg0 : i32 to index
      %25 = arith.index_cast %arg2 : i32 to index
      %c5 = arith.constant 5 : index
      %26 = memref.load %arg3[%24, %25, %c5] : memref<2x2x32xf32, #tpu.memory_space<smem>>
      %27 = arith.index_cast %arg0 : i32 to index
      %28 = arith.index_cast %arg2 : i32 to index
      %c6 = arith.constant 6 : index
      %29 = memref.load %arg3[%27, %28, %c6] : memref<2x2x32xf32, #tpu.memory_space<smem>>
      %30 = arith.index_cast %arg0 : i32 to index
      %31 = arith.index_cast %arg2 : i32 to index
      %c7 = arith.constant 7 : index
      %32 = memref.load %arg3[%30, %31, %c7] : memref<2x2x32xf32, #tpu.memory_space<smem>>
      %33 = arith.index_cast %arg0 : i32 to index
      %34 = arith.index_cast %arg2 : i32 to index
      %c8 = arith.constant 8 : index
      %35 = memref.load %arg3[%33, %34, %c8] : memref<2x2x32xf32, #tpu.memory_space<smem>>
      %36 = arith.index_cast %arg0 : i32 to index
      %37 = arith.index_cast %arg2 : i32 to index
      %c9 = arith.constant 9 : index
      %38 = memref.load %arg3[%36, %37, %c9] : memref<2x2x32xf32, #tpu.memory_space<smem>>
      %39 = arith.index_cast %arg0 : i32 to index
      %40 = arith.index_cast %arg2 : i32 to index
      %c10 = arith.constant 10 : index
      %41 = memref.load %arg3[%39, %40, %c10] : memref<2x2x32xf32, #tpu.memory_space<smem>>
      %42 = arith.index_cast %arg0 : i32 to index
      %43 = arith.index_cast %arg2 : i32 to index
      %c11 = arith.constant 11 : index
      %44 = memref.load %arg3[%42, %43, %c11] : memref<2x2x32xf32, #tpu.memory_space<smem>>
      %45 = arith.index_cast %arg0 : i32 to index
      %46 = arith.index_cast %arg2 : i32 to index
      %c12 = arith.constant 12 : index
      %47 = memref.load %arg3[%45, %46, %c12] : memref<2x2x32xf32, #tpu.memory_space<smem>>
      %48 = arith.index_cast %arg0 : i32 to index
      %49 = arith.index_cast %arg2 : i32 to index
      %c13 = arith.constant 13 : index
      %50 = memref.load %arg3[%48, %49, %c13] : memref<2x2x32xf32, #tpu.memory_space<smem>>
      %51 = arith.index_cast %arg0 : i32 to index
      %52 = arith.index_cast %arg2 : i32 to index
      %c14 = arith.constant 14 : index
      %53 = memref.load %arg3[%51, %52, %c14] : memref<2x2x32xf32, #tpu.memory_space<smem>>
      %54 = arith.index_cast %arg0 : i32 to index
      %55 = arith.index_cast %arg2 : i32 to index
      %c15 = arith.constant 15 : index
      %56 = memref.load %arg3[%54, %55, %c15] : memref<2x2x32xf32, #tpu.memory_space<smem>>
      %57 = arith.index_cast %arg0 : i32 to index
      %58 = arith.index_cast %arg2 : i32 to index
      %c16 = arith.constant 16 : index
      %59 = memref.load %arg3[%57, %58, %c16] : memref<2x2x32xf32, #tpu.memory_space<smem>>
      %60 = arith.index_cast %arg0 : i32 to index
      %61 = arith.index_cast %arg2 : i32 to index
      %c17 = arith.constant 17 : index
      %62 = memref.load %arg3[%60, %61, %c17] : memref<2x2x32xf32, #tpu.memory_space<smem>>
      %63 = arith.index_cast %arg0 : i32 to index
      %64 = arith.index_cast %arg2 : i32 to index
      %c18 = arith.constant 18 : index
      %65 = memref.load %arg3[%63, %64, %c18] : memref<2x2x32xf32, #tpu.memory_space<smem>>
      %66 = arith.index_cast %arg0 : i32 to index
      %67 = arith.index_cast %arg2 : i32 to index
      %c19 = arith.constant 19 : index
      %68 = memref.load %arg3[%66, %67, %c19] : memref<2x2x32xf32, #tpu.memory_space<smem>>
      %69 = arith.index_cast %arg0 : i32 to index
      %70 = arith.index_cast %arg2 : i32 to index
      %c20 = arith.constant 20 : index
      %71 = memref.load %arg3[%69, %70, %c20] : memref<2x2x32xf32, #tpu.memory_space<smem>>
      %72 = arith.index_cast %arg0 : i32 to index
      %73 = arith.index_cast %arg2 : i32 to index
      %c21 = arith.constant 21 : index
      %74 = memref.load %arg3[%72, %73, %c21] : memref<2x2x32xf32, #tpu.memory_space<smem>>
      %75 = arith.index_cast %arg0 : i32 to index
      %76 = arith.index_cast %arg2 : i32 to index
      %c22 = arith.constant 22 : index
      %77 = memref.load %arg3[%75, %76, %c22] : memref<2x2x32xf32, #tpu.memory_space<smem>>
      %78 = arith.index_cast %arg0 : i32 to index
      %79 = arith.index_cast %arg2 : i32 to index
      %c23 = arith.constant 23 : index
      %80 = memref.load %arg3[%78, %79, %c23] : memref<2x2x32xf32, #tpu.memory_space<smem>>
      %81 = arith.index_cast %arg0 : i32 to index
      %82 = arith.index_cast %arg2 : i32 to index
      %c24 = arith.constant 24 : index
      %83 = memref.load %arg3[%81, %82, %c24] : memref<2x2x32xf32, #tpu.memory_space<smem>>
      %84 = arith.index_cast %arg0 : i32 to index
      %85 = arith.index_cast %arg2 : i32 to index
      %c25 = arith.constant 25 : index
      %86 = memref.load %arg3[%84, %85, %c25] : memref<2x2x32xf32, #tpu.memory_space<smem>>
      %87 = arith.index_cast %arg0 : i32 to index
      %88 = arith.index_cast %arg2 : i32 to index
      %c26 = arith.constant 26 : index
      %89 = memref.load %arg3[%87, %88, %c26] : memref<2x2x32xf32, #tpu.memory_space<smem>>
      %90 = arith.index_cast %arg0 : i32 to index
      %91 = arith.index_cast %arg2 : i32 to index
      %c27 = arith.constant 27 : index
      %92 = memref.load %arg3[%90, %91, %c27] : memref<2x2x32xf32, #tpu.memory_space<smem>>
      %93 = arith.index_cast %arg0 : i32 to index
      %94 = arith.index_cast %arg2 : i32 to index
      %c28 = arith.constant 28 : index
      %95 = memref.load %arg3[%93, %94, %c28] : memref<2x2x32xf32, #tpu.memory_space<smem>>
      %cst_2 = arith.constant 1.000000e+00 : f32
      %96 = arith.divf %cst_2, %47 : f32
      %cst_3 = arith.constant 1.000000e+00 : f32
      %97 = arith.divf %cst_3, %50 : f32
      %c0_4 = arith.constant 0 : index
      %c0_5 = arith.constant 0 : index
      %c0_6 = arith.constant 0 : index
      %c0_7 = arith.constant 0 : index
      %98 = vector.load %arg4[%c0_4, %c0_5, %c0_6, %c0_7] : memref<1x1x6x128xf32, #tpu.memory_space<vmem>>, vector<1x1x2x128xf32>
      %99 = vector.shape_cast %98 : vector<1x1x2x128xf32> to vector<2x128xf32>
      %c0_8 = arith.constant 0 : index
      %c0_9 = arith.constant 0 : index
      %c2_10 = arith.constant 2 : index
      %c0_11 = arith.constant 0 : index
      %100 = vector.load %arg4[%c0_8, %c0_9, %c2_10, %c0_11] : memref<1x1x6x128xf32, #tpu.memory_space<vmem>>, vector<1x1x2x128xf32>
      %101 = vector.shape_cast %100 : vector<1x1x2x128xf32> to vector<2x128xf32>
      %c0_12 = arith.constant 0 : index
      %c0_13 = arith.constant 0 : index
      %c4_14 = arith.constant 4 : index
      %c0_15 = arith.constant 0 : index
      %102 = vector.load %arg4[%c0_12, %c0_13, %c4_14, %c0_15] : memref<1x1x6x128xf32, #tpu.memory_space<vmem>>, vector<1x1x2x128xf32>
      %103 = vector.shape_cast %102 : vector<1x1x2x128xf32> to vector<2x128xf32>
      %104 = vector.broadcast %11 : f32 to vector<2x128xf32>
      %105 = arith.mulf %104, %99 : vector<2x128xf32>
      %106 = vector.broadcast %14 : f32 to vector<2x128xf32>
      %107 = arith.mulf %106, %101 : vector<2x128xf32>
      %108 = arith.addf %105, %107 : vector<2x128xf32>
      %109 = vector.broadcast %17 : f32 to vector<2x128xf32>
      %110 = arith.mulf %109, %103 : vector<2x128xf32>
      %111 = arith.addf %108, %110 : vector<2x128xf32>
      %112 = vector.broadcast %20 : f32 to vector<2x128xf32>
      %113 = arith.addf %111, %112 : vector<2x128xf32>
      %114 = vector.broadcast %23 : f32 to vector<2x128xf32>
      %115 = arith.mulf %114, %99 : vector<2x128xf32>
      %116 = vector.broadcast %26 : f32 to vector<2x128xf32>
      %117 = arith.mulf %116, %101 : vector<2x128xf32>
      %118 = arith.addf %115, %117 : vector<2x128xf32>
      %119 = vector.broadcast %29 : f32 to vector<2x128xf32>
      %120 = arith.mulf %119, %103 : vector<2x128xf32>
      %121 = arith.addf %118, %120 : vector<2x128xf32>
      %122 = vector.broadcast %32 : f32 to vector<2x128xf32>
      %123 = arith.addf %121, %122 : vector<2x128xf32>
      %124 = vector.broadcast %35 : f32 to vector<2x128xf32>
      %125 = arith.mulf %124, %99 : vector<2x128xf32>
      %126 = vector.broadcast %38 : f32 to vector<2x128xf32>
      %127 = arith.mulf %126, %101 : vector<2x128xf32>
      %128 = arith.addf %125, %127 : vector<2x128xf32>
      %129 = vector.broadcast %41 : f32 to vector<2x128xf32>
      %130 = arith.mulf %129, %103 : vector<2x128xf32>
      %131 = arith.addf %128, %130 : vector<2x128xf32>
      %132 = vector.broadcast %44 : f32 to vector<2x128xf32>
      %133 = arith.addf %131, %132 : vector<2x128xf32>
      %cst_16 = arith.constant 0.000000e+00 : f32
      %134 = vector.broadcast %cst_16 : f32 to vector<2x128xf32>
      %135 = arith.cmpf ogt, %133, %134 : vector<2x128xf32>
      %136 = arith.extui %135 : vector<2x128xi1> to vector<2x128xi32>
      %137 = arith.sitofp %136 : vector<2x128xi32> to vector<2x128xf32>
      %cst_17 = arith.constant 0.000000e+00 : f32
      %138 = vector.broadcast %cst_17 : f32 to vector<2x128xf32>
      %139 = arith.cmpf ogt, %133, %138 : vector<2x128xf32>
      %cst_18 = arith.constant 1.000000e+00 : f32
      %140 = vector.broadcast %cst_18 : f32 to vector<2x128xf32>
      %141 = arith.select %139, %133, %140 : vector<2x128xi1>, vector<2x128xf32>
      %142 = tpu.reciprocal %141 {approx = true} : vector<2x128xf32> -> vector<2x128xf32>
      %143 = arith.mulf %141, %142 : vector<2x128xf32>
      %cst_19 = arith.constant 2.000000e+00 : f32
      %144 = vector.broadcast %cst_19 : f32 to vector<2x128xf32>
      %145 = arith.subf %144, %143 : vector<2x128xf32>
      %146 = arith.mulf %142, %145 : vector<2x128xf32>
      %147 = arith.mulf %113, %137 : vector<2x128xf32>
      %148 = arith.mulf %147, %146 : vector<2x128xf32>
      %149 = arith.mulf %123, %137 : vector<2x128xf32>
      %150 = arith.mulf %149, %146 : vector<2x128xf32>
      %151 = vector.broadcast %53 : f32 to vector<2x128xf32>
      %152 = arith.subf %148, %151 : vector<2x128xf32>
      %153 = vector.broadcast %96 : f32 to vector<2x128xf32>
      %154 = arith.mulf %152, %153 : vector<2x128xf32>
      %155 = vector.broadcast %56 : f32 to vector<2x128xf32>
      %156 = arith.subf %150, %155 : vector<2x128xf32>
      %157 = vector.broadcast %97 : f32 to vector<2x128xf32>
      %158 = arith.mulf %156, %157 : vector<2x128xf32>
      %159 = arith.mulf %154, %154 : vector<2x128xf32>
      %160 = arith.mulf %158, %158 : vector<2x128xf32>
      %161 = arith.addf %159, %160 : vector<2x128xf32>
      %cst_20 = arith.constant 5.000000e-01 : f32
      %162 = arith.cmpf ogt, %77, %cst_20 : f32
      %163 = arith.extui %162 : i1 to i32
      %c0_i32_21 = arith.constant 0 : i32
      %164 = arith.cmpi ne, %163, %c0_i32_21 : i32
      scf.if %164 {
        %271 = math.sqrt %161 : vector<2x128xf32>
        %cst_52 = arith.constant 2.41421366 : f32
        %272 = vector.broadcast %cst_52 : f32 to vector<2x128xf32>
        %273 = arith.cmpf ogt, %271, %272 : vector<2x128xf32>
        %cst_53 = arith.constant 0.414213568 : f32
        %274 = vector.broadcast %cst_53 : f32 to vector<2x128xf32>
        %275 = arith.cmpf ogt, %271, %274 : vector<2x128xf32>
        %cst_54 = arith.constant dense<true> : vector<2x128xi1>
        %276 = arith.xori %273, %cst_54 : vector<2x128xi1>
        %277 = arith.andi %275, %276 : vector<2x128xi1>
        %cst_55 = arith.constant 0.785398185 : f32
        %cst_56 = arith.constant 0.000000e+00 : f32
        %278 = vector.broadcast %cst_55 : f32 to vector<2x128xf32>
        %279 = vector.broadcast %cst_56 : f32 to vector<2x128xf32>
        %280 = arith.select %277, %278, %279 : vector<2x128xi1>, vector<2x128xf32>
        %cst_57 = arith.constant 1.57079637 : f32
        %281 = vector.broadcast %cst_57 : f32 to vector<2x128xf32>
        %282 = arith.select %273, %281, %280 : vector<2x128xi1>, vector<2x128xf32>
        %cst_58 = arith.constant 1.000000e-30 : f32
        %283 = vector.broadcast %cst_58 : f32 to vector<2x128xf32>
        %284 = arith.maximumf %271, %283 : vector<2x128xf32>
        %285 = tpu.reciprocal %284 {approx = true} : vector<2x128xf32> -> vector<2x128xf32>
        %286 = arith.mulf %284, %285 : vector<2x128xf32>
        %cst_59 = arith.constant 2.000000e+00 : f32
        %287 = vector.broadcast %cst_59 : f32 to vector<2x128xf32>
        %288 = arith.subf %287, %286 : vector<2x128xf32>
        %289 = arith.mulf %285, %288 : vector<2x128xf32>
        %cst_60 = arith.constant 0.000000e+00 : f32
        %290 = vector.broadcast %cst_60 : f32 to vector<2x128xf32>
        %291 = arith.subf %290, %289 : vector<2x128xf32>
        %cst_61 = arith.constant 1.000000e+00 : f32
        %292 = vector.broadcast %cst_61 : f32 to vector<2x128xf32>
        %293 = arith.subf %271, %292 : vector<2x128xf32>
        %cst_62 = arith.constant 1.000000e+00 : f32
        %294 = vector.broadcast %cst_62 : f32 to vector<2x128xf32>
        %295 = arith.addf %271, %294 : vector<2x128xf32>
        %296 = tpu.reciprocal %295 {approx = true} : vector<2x128xf32> -> vector<2x128xf32>
        %297 = arith.mulf %295, %296 : vector<2x128xf32>
        %cst_63 = arith.constant 2.000000e+00 : f32
        %298 = vector.broadcast %cst_63 : f32 to vector<2x128xf32>
        %299 = arith.subf %298, %297 : vector<2x128xf32>
        %300 = arith.mulf %296, %299 : vector<2x128xf32>
        %301 = arith.mulf %293, %300 : vector<2x128xf32>
        %302 = arith.select %277, %301, %271 : vector<2x128xi1>, vector<2x128xf32>
        %303 = arith.select %273, %291, %302 : vector<2x128xi1>, vector<2x128xf32>
        %304 = arith.mulf %303, %303 : vector<2x128xf32>
        %cst_64 = arith.constant 0.0805374458 : f32
        %305 = vector.broadcast %cst_64 : f32 to vector<2x128xf32>
        %306 = arith.mulf %305, %304 : vector<2x128xf32>
        %cst_65 = arith.constant 0.138776854 : f32
        %307 = vector.broadcast %cst_65 : f32 to vector<2x128xf32>
        %308 = arith.subf %306, %307 : vector<2x128xf32>
        %309 = arith.mulf %308, %304 : vector<2x128xf32>
        %cst_66 = arith.constant 0.199777111 : f32
        %310 = vector.broadcast %cst_66 : f32 to vector<2x128xf32>
        %311 = arith.addf %309, %310 : vector<2x128xf32>
        %312 = arith.mulf %311, %304 : vector<2x128xf32>
        %cst_67 = arith.constant 0.333329499 : f32
        %313 = vector.broadcast %cst_67 : f32 to vector<2x128xf32>
        %314 = arith.subf %312, %313 : vector<2x128xf32>
        %315 = arith.mulf %314, %304 : vector<2x128xf32>
        %316 = arith.mulf %315, %303 : vector<2x128xf32>
        %317 = arith.addf %316, %303 : vector<2x128xf32>
        %318 = arith.addf %282, %317 : vector<2x128xf32>
        %319 = arith.mulf %318, %318 : vector<2x128xf32>
        %320 = vector.broadcast %59 : f32 to vector<2x128xf32>
        %321 = arith.mulf %320, %319 : vector<2x128xf32>
        %cst_68 = arith.constant 1.000000e+00 : f32
        %322 = vector.broadcast %cst_68 : f32 to vector<2x128xf32>
        %323 = arith.addf %322, %321 : vector<2x128xf32>
        %324 = vector.broadcast %62 : f32 to vector<2x128xf32>
        %325 = arith.mulf %324, %319 : vector<2x128xf32>
        %326 = arith.mulf %325, %319 : vector<2x128xf32>
        %327 = arith.addf %323, %326 : vector<2x128xf32>
        %328 = vector.broadcast %65 : f32 to vector<2x128xf32>
        %329 = arith.mulf %328, %319 : vector<2x128xf32>
        %330 = arith.mulf %329, %319 : vector<2x128xf32>
        %331 = arith.mulf %330, %319 : vector<2x128xf32>
        %332 = arith.addf %327, %331 : vector<2x128xf32>
        %333 = vector.broadcast %74 : f32 to vector<2x128xf32>
        %334 = arith.mulf %333, %319 : vector<2x128xf32>
        %335 = arith.mulf %334, %319 : vector<2x128xf32>
        %336 = arith.mulf %335, %319 : vector<2x128xf32>
        %337 = arith.mulf %336, %319 : vector<2x128xf32>
        %338 = arith.addf %332, %337 : vector<2x128xf32>
        %339 = arith.mulf %318, %338 : vector<2x128xf32>
        %cst_69 = arith.constant 9.99999968E-21 : f32
        %340 = vector.broadcast %cst_69 : f32 to vector<2x128xf32>
        %341 = arith.maximumf %271, %340 : vector<2x128xf32>
        %342 = tpu.reciprocal %341 {approx = true} : vector<2x128xf32> -> vector<2x128xf32>
        %343 = arith.mulf %341, %342 : vector<2x128xf32>
        %cst_70 = arith.constant 2.000000e+00 : f32
        %344 = vector.broadcast %cst_70 : f32 to vector<2x128xf32>
        %345 = arith.subf %344, %343 : vector<2x128xf32>
        %346 = arith.mulf %342, %345 : vector<2x128xf32>
        %347 = arith.mulf %339, %346 : vector<2x128xf32>
        %348 = arith.mulf %154, %347 : vector<2x128xf32>
        %c0_71 = arith.constant 0 : index
        %c0_72 = arith.constant 0 : index
        %349 = vector.load %arg7[%c0_71, %c0_72] : memref<2x128xf32, #tpu.memory_space<vmem>>, vector<2x128xf32>
        tpu.vector_store %arg7[%c0_71, %c0_72], %348 {strides = array<i32>} : memref<2x128xf32, #tpu.memory_space<vmem>>, vector<2x128xf32>,
        %350 = arith.mulf %158, %347 : vector<2x128xf32>
        %c0_73 = arith.constant 0 : index
        %c0_74 = arith.constant 0 : index
        %351 = vector.load %arg8[%c0_73, %c0_74] : memref<2x128xf32, #tpu.memory_space<vmem>>, vector<2x128xf32>
        tpu.vector_store %arg8[%c0_73, %c0_74], %350 {strides = array<i32>} : memref<2x128xf32, #tpu.memory_space<vmem>>, vector<2x128xf32>,
      } else {
      }
      %cst_22 = arith.constant 5.000000e-01 : f32
      %165 = arith.cmpf ole, %77, %cst_22 : f32
      %166 = arith.extui %165 : i1 to i32
      %c0_i32_23 = arith.constant 0 : i32
      %167 = arith.cmpi ne, %166, %c0_i32_23 : i32
      scf.if %167 {
        %271 = vector.broadcast %59 : f32 to vector<2x128xf32>
        %272 = arith.mulf %271, %161 : vector<2x128xf32>
        %cst_52 = arith.constant 1.000000e+00 : f32
        %273 = vector.broadcast %cst_52 : f32 to vector<2x128xf32>
        %274 = arith.addf %273, %272 : vector<2x128xf32>
        %275 = vector.broadcast %62 : f32 to vector<2x128xf32>
        %276 = arith.mulf %275, %161 : vector<2x128xf32>
        %277 = arith.mulf %276, %161 : vector<2x128xf32>
        %278 = arith.addf %274, %277 : vector<2x128xf32>
        %279 = vector.broadcast %65 : f32 to vector<2x128xf32>
        %280 = arith.mulf %279, %161 : vector<2x128xf32>
        %281 = arith.mulf %280, %161 : vector<2x128xf32>
        %282 = arith.mulf %281, %161 : vector<2x128xf32>
        %283 = arith.addf %278, %282 : vector<2x128xf32>
        %284 = arith.mulf %154, %283 : vector<2x128xf32>
        %cst_53 = arith.constant 2.000000e+00 : f32
        %285 = arith.mulf %cst_53, %68 : f32
        %286 = vector.broadcast %285 : f32 to vector<2x128xf32>
        %287 = arith.mulf %286, %154 : vector<2x128xf32>
        %288 = arith.mulf %287, %158 : vector<2x128xf32>
        %cst_54 = arith.constant 2.000000e+00 : f32
        %289 = vector.broadcast %cst_54 : f32 to vector<2x128xf32>
        %290 = arith.mulf %289, %154 : vector<2x128xf32>
        %291 = arith.mulf %290, %154 : vector<2x128xf32>
        %292 = arith.addf %161, %291 : vector<2x128xf32>
        %293 = vector.broadcast %71 : f32 to vector<2x128xf32>
        %294 = arith.mulf %293, %292 : vector<2x128xf32>
        %295 = arith.addf %288, %294 : vector<2x128xf32>
        %296 = arith.addf %284, %295 : vector<2x128xf32>
        %c0_55 = arith.constant 0 : index
        %c0_56 = arith.constant 0 : index
        %297 = vector.load %arg7[%c0_55, %c0_56] : memref<2x128xf32, #tpu.memory_space<vmem>>, vector<2x128xf32>
        tpu.vector_store %arg7[%c0_55, %c0_56], %296 {strides = array<i32>} : memref<2x128xf32, #tpu.memory_space<vmem>>, vector<2x128xf32>,
        %298 = arith.mulf %158, %283 : vector<2x128xf32>
        %cst_57 = arith.constant 2.000000e+00 : f32
        %299 = vector.broadcast %cst_57 : f32 to vector<2x128xf32>
        %300 = arith.mulf %299, %158 : vector<2x128xf32>
        %301 = arith.mulf %300, %158 : vector<2x128xf32>
        %302 = arith.addf %161, %301 : vector<2x128xf32>
        %303 = vector.broadcast %68 : f32 to vector<2x128xf32>
        %304 = arith.mulf %303, %302 : vector<2x128xf32>
        %cst_58 = arith.constant 2.000000e+00 : f32
        %305 = arith.mulf %cst_58, %71 : f32
        %306 = vector.broadcast %305 : f32 to vector<2x128xf32>
        %307 = arith.mulf %306, %154 : vector<2x128xf32>
        %308 = arith.mulf %307, %158 : vector<2x128xf32>
        %309 = arith.addf %304, %308 : vector<2x128xf32>
        %310 = arith.addf %298, %309 : vector<2x128xf32>
        %c0_59 = arith.constant 0 : index
        %c0_60 = arith.constant 0 : index
        %311 = vector.load %arg8[%c0_59, %c0_60] : memref<2x128xf32, #tpu.memory_space<vmem>>, vector<2x128xf32>
        tpu.vector_store %arg8[%c0_59, %c0_60], %310 {strides = array<i32>} : memref<2x128xf32, #tpu.memory_space<vmem>>, vector<2x128xf32>,
      } else {
      }
      %c0_24 = arith.constant 0 : index
      %c0_25 = arith.constant 0 : index
      %168 = vector.load %arg7[%c0_24, %c0_25] : memref<2x128xf32, #tpu.memory_space<vmem>>, vector<2x128xf32>
      %169 = vector.broadcast %47 : f32 to vector<2x128xf32>
      %170 = arith.mulf %168, %169 : vector<2x128xf32>
      %171 = vector.broadcast %53 : f32 to vector<2x128xf32>
      %172 = arith.addf %170, %171 : vector<2x128xf32>
      %173 = arith.mulf %172, %137 : vector<2x128xf32>
      %c0_26 = arith.constant 0 : index
      %c0_27 = arith.constant 0 : index
      %174 = vector.load %arg8[%c0_26, %c0_27] : memref<2x128xf32, #tpu.memory_space<vmem>>, vector<2x128xf32>
      %175 = vector.broadcast %50 : f32 to vector<2x128xf32>
      %176 = arith.mulf %174, %175 : vector<2x128xf32>
      %177 = vector.broadcast %56 : f32 to vector<2x128xf32>
      %178 = arith.addf %176, %177 : vector<2x128xf32>
      %179 = arith.mulf %178, %137 : vector<2x128xf32>
      %180 = vector.broadcast %80 : f32 to vector<2x128xf32>
      %181 = arith.mulf %180, %173 : vector<2x128xf32>
      %182 = vector.broadcast %83 : f32 to vector<2x128xf32>
      %183 = arith.mulf %182, %179 : vector<2x128xf32>
      %184 = arith.addf %181, %183 : vector<2x128xf32>
      %185 = vector.broadcast %92 : f32 to vector<2x128xf32>
      %186 = arith.addf %184, %185 : vector<2x128xf32>
      %cst_28 = arith.constant 1.000000e+00 : f32
      %187 = vector.broadcast %cst_28 : f32 to vector<2x128xf32>
      %188 = arith.mulf %186, %187 : vector<2x128xf32>
      %189 = vector.broadcast %86 : f32 to vector<2x128xf32>
      %190 = arith.mulf %189, %173 : vector<2x128xf32>
      %191 = vector.broadcast %89 : f32 to vector<2x128xf32>
      %192 = arith.mulf %191, %179 : vector<2x128xf32>
      %193 = arith.addf %190, %192 : vector<2x128xf32>
      %194 = vector.broadcast %95 : f32 to vector<2x128xf32>
      %195 = arith.addf %193, %194 : vector<2x128xf32>
      %cst_29 = arith.constant 1.000000e+00 : f32
      %196 = vector.broadcast %cst_29 : f32 to vector<2x128xf32>
      %197 = arith.mulf %195, %196 : vector<2x128xf32>
      %198 = arith.fptosi %188 : vector<2x128xf32> to vector<2x128xi32>
      %199 = arith.fptosi %197 : vector<2x128xf32> to vector<2x128xi32>
      %c0_i32_30 = arith.constant 0 : i32
      %200 = vector.broadcast %c0_i32_30 : i32 to vector<2x128xi32>
      %201 = arith.cmpi sgt, %198, %200 : vector<2x128xi32>
      %c16_i32 = arith.constant 16 : i32
      %202 = vector.broadcast %c16_i32 : i32 to vector<2x128xi32>
      %203 = arith.cmpi slt, %198, %202 : vector<2x128xi32>
      %204 = arith.andi %201, %203 : vector<2x128xi1>
      %c0_i32_31 = arith.constant 0 : i32
      %205 = vector.broadcast %c0_i32_31 : i32 to vector<2x128xi32>
      %206 = arith.cmpi sgt, %199, %205 : vector<2x128xi32>
      %207 = arith.andi %204, %206 : vector<2x128xi1>
      %c16_i32_32 = arith.constant 16 : i32
      %208 = vector.broadcast %c16_i32_32 : i32 to vector<2x128xi32>
      %209 = arith.cmpi slt, %199, %208 : vector<2x128xi32>
      %210 = arith.andi %207, %209 : vector<2x128xi1>
      %c-1_i32 = arith.constant -1 : i32
      %211 = vector.broadcast %c-1_i32 : i32 to vector<2x128xi32>
      %212 = arith.select %210, %198, %211 : vector<2x128xi1>, vector<2x128xi32>
      %c0_33 = arith.constant 0 : index
      %c0_34 = arith.constant 0 : index
      %c0_35 = arith.constant 0 : index
      %c0_36 = arith.constant 0 : index
      %213 = vector.load %arg5[%c0_33, %c0_34, %c0_35, %c0_36] : memref<1x1x64x16xbf16, #tpu.memory_space<vmem>>, vector<1x1x64x16xbf16>
      %214 = vector.shape_cast %213 : vector<1x1x64x16xbf16> to vector<64x16xbf16>
      %215 = tpu.iota {dimensions = array<i32: 0>} : vector<16x128xi32>
      %216 = tpu.iota {dimensions = array<i32: 0>} : vector<16x128xi32>
      %217 = vector.extract_strided_slice %212 {offsets = [0, 0], sizes = [1, 128], strides = [1, 1]} : vector<2x128xi32> to vector<1x128xi32>
      %218 = vector.shape_cast %217 : vector<1x128xi32> to vector<128xi32>
      %219 = vector.shape_cast %218 : vector<128xi32> to vector<1x128xi32>
      %220 = vector.broadcast %219 : vector<1x128xi32> to vector<16x128xi32>
      %221 = arith.cmpi eq, %215, %220 : vector<16x128xi32>
      %222 = arith.extui %221 : vector<16x128xi1> to vector<16x128xi32>
      %223 = arith.sitofp %222 : vector<16x128xi32> to vector<16x128xf32>
      %224 = arith.truncf %223 : vector<16x128xf32> to vector<16x128xbf16>
      %cst_37 = arith.constant dense<0.000000e+00> : vector<64x128xf32>
      %225 = tpu.matmul %214, %224, %cst_37 {dimension_numbers = #tpu.dot_dimension_numbers<[1], [0], [0], [1], [0, 0, 1, 1], [], []>} : vector<64x16xbf16>, vector<16x128xbf16>, vector<64x128xf32> -> vector<64x128xf32>
      %226 = vector.extract_strided_slice %199 {offsets = [0, 0], sizes = [1, 128], strides = [1, 1]} : vector<2x128xi32> to vector<1x128xi32>
      %227 = vector.shape_cast %226 : vector<1x128xi32> to vector<128xi32>
      %228 = vector.shape_cast %227 : vector<128xi32> to vector<1x128xi32>
      %229 = vector.broadcast %228 : vector<1x128xi32> to vector<16x128xi32>
      %230 = arith.cmpi eq, %216, %229 : vector<16x128xi32>
      %231 = arith.extui %230 : vector<16x128xi1> to vector<16x128xi32>
      %232 = arith.sitofp %231 : vector<16x128xi32> to vector<16x128xf32>
      %233 = vector.shape_cast %225 : vector<64x128xf32> to vector<4x16x128xf32>
      %234 = vector.shape_cast %232 : vector<16x128xf32> to vector<1x16x128xf32>
      %235 = vector.broadcast %234 : vector<1x16x128xf32> to vector<4x16x128xf32>
      %236 = arith.mulf %233, %235 : vector<4x16x128xf32>
      %cst_38 = arith.constant dense<0.000000e+00> : vector<4x128xf32>
      %237 = vector.multi_reduction <add>, %236, %cst_38 [1] : vector<4x16x128xf32> to vector<4x128xf32>
      %c0_39 = arith.constant 0 : index
      %c0_40 = arith.constant 0 : index
      %c0_41 = arith.constant 0 : index
      %238 = vector.load %arg6[%c0_39, %c0_40, %c0_41] : memref<1x4x256xf32, #tpu.memory_space<vmem>>, vector<1x4x128xf32>
      %239 = vector.shape_cast %238 : vector<1x4x128xf32> to vector<4x128xf32>
      %240 = arith.maximumf %239, %237 : vector<4x128xf32>
      %c0_42 = arith.constant 0 : index
      %c0_43 = arith.constant 0 : index
      %c0_44 = arith.constant 0 : index
      %241 = vector.load %arg6[%c0_42, %c0_43, %c0_44] : memref<1x4x256xf32, #tpu.memory_space<vmem>>, vector<1x4x128xf32>
      %242 = vector.shape_cast %241 : vector<1x4x128xf32> to vector<4x128xf32>
      %243 = vector.shape_cast %240 : vector<4x128xf32> to vector<1x4x128xf32>
      tpu.vector_store %arg6[%c0_42, %c0_43, %c0_44], %243 {strides = array<i32>} : memref<1x4x256xf32, #tpu.memory_space<vmem>>, vector<1x4x128xf32>,
      %244 = vector.extract_strided_slice %212 {offsets = [1, 0], sizes = [1, 128], strides = [1, 1]} : vector<2x128xi32> to vector<1x128xi32>
      %245 = vector.shape_cast %244 : vector<1x128xi32> to vector<128xi32>
      %246 = vector.shape_cast %245 : vector<128xi32> to vector<1x128xi32>
      %247 = vector.broadcast %246 : vector<1x128xi32> to vector<16x128xi32>
      %248 = arith.cmpi eq, %215, %247 : vector<16x128xi32>
      %249 = arith.extui %248 : vector<16x128xi1> to vector<16x128xi32>
      %250 = arith.sitofp %249 : vector<16x128xi32> to vector<16x128xf32>
      %251 = arith.truncf %250 : vector<16x128xf32> to vector<16x128xbf16>
      %cst_45 = arith.constant dense<0.000000e+00> : vector<64x128xf32>
      %252 = tpu.matmul %214, %251, %cst_45 {dimension_numbers = #tpu.dot_dimension_numbers<[1], [0], [0], [1], [0, 0, 1, 1], [], []>} : vector<64x16xbf16>, vector<16x128xbf16>, vector<64x128xf32> -> vector<64x128xf32>
      %253 = vector.extract_strided_slice %199 {offsets = [1, 0], sizes = [1, 128], strides = [1, 1]} : vector<2x128xi32> to vector<1x128xi32>
      %254 = vector.shape_cast %253 : vector<1x128xi32> to vector<128xi32>
      %255 = vector.shape_cast %254 : vector<128xi32> to vector<1x128xi32>
      %256 = vector.broadcast %255 : vector<1x128xi32> to vector<16x128xi32>
      %257 = arith.cmpi eq, %216, %256 : vector<16x128xi32>
      %258 = arith.extui %257 : vector<16x128xi1> to vector<16x128xi32>
      %259 = arith.sitofp %258 : vector<16x128xi32> to vector<16x128xf32>
      %260 = vector.shape_cast %252 : vector<64x128xf32> to vector<4x16x128xf32>
      %261 = vector.shape_cast %259 : vector<16x128xf32> to vector<1x16x128xf32>
      %262 = vector.broadcast %261 : vector<1x16x128xf32> to vector<4x16x128xf32>
      %263 = arith.mulf %260, %262 : vector<4x16x128xf32>
      %cst_46 = arith.constant dense<0.000000e+00> : vector<4x128xf32>
      %264 = vector.multi_reduction <add>, %263, %cst_46 [1] : vector<4x16x128xf32> to vector<4x128xf32>
      %c0_47 = arith.constant 0 : index
      %c0_48 = arith.constant 0 : index
      %c128 = arith.constant 128 : index
      %265 = vector.load %arg6[%c0_47, %c0_48, %c128] : memref<1x4x256xf32, #tpu.memory_space<vmem>>, vector<1x4x128xf32>
      %266 = vector.shape_cast %265 : vector<1x4x128xf32> to vector<4x128xf32>
      %267 = arith.maximumf %266, %264 : vector<4x128xf32>
      %c0_49 = arith.constant 0 : index
      %c0_50 = arith.constant 0 : index
      %c128_51 = arith.constant 128 : index
      %268 = vector.load %arg6[%c0_49, %c0_50, %c128_51] : memref<1x4x256xf32, #tpu.memory_space<vmem>>, vector<1x4x128xf32>
      %269 = vector.shape_cast %268 : vector<1x4x128xf32> to vector<4x128xf32>
      %270 = vector.shape_cast %267 : vector<4x128xf32> to vector<1x4x128xf32>
      tpu.vector_store %arg6[%c0_49, %c0_50, %c128_51], %270 {strides = array<i32>} : memref<1x4x256xf32, #tpu.memory_space<vmem>>, vector<1x4x128xf32>,
    } else {
    }
    return
  }
  func.func @transform_0(%arg0: i32, %arg1: i32, %arg2: i32) -> (i32, i32, i32) {
    %c0_i32 = arith.constant 0 : i32
    %c0_i32_0 = arith.constant 0 : i32
    %c0_i32_1 = arith.constant 0 : i32
    %c0_i32_2 = arith.constant 0 : i32
    return %c0_i32, %c0_i32_0, %c0_i32_1 : i32, i32, i32
  }
  func.func @transform_1(%arg0: i32, %arg1: i32, %arg2: i32) -> (i32, i32, i32, i32) {
    %c0_i32 = arith.constant 0 : i32
    %c0_i32_0 = arith.constant 0 : i32
    %c0_i32_1 = arith.constant 0 : i32
    return %arg0, %arg1, %c0_i32, %c0_i32_0 : i32, i32, i32, i32
  }
  func.func @transform_2(%arg0: i32, %arg1: i32, %arg2: i32) -> (i32, i32, i32, i32) {
    %c0_i32 = arith.constant 0 : i32
    %c0_i32_0 = arith.constant 0 : i32
    %c0_i32_1 = arith.constant 0 : i32
    return %arg0, %arg2, %c0_i32, %c0_i32_0 : i32, i32, i32, i32
  }
  func.func @transform_3(%arg0: i32, %arg1: i32, %arg2: i32) -> (i32, i32, i32) {
    %c0_i32 = arith.constant 0 : i32
    %c0_i32_0 = arith.constant 0 : i32
    return %arg0, %c0_i32, %arg1 : i32, i32, i32
  }
}

</mosaic_0001>

<llo_original>
// kernel: tpu_custom_call.1
$region0: #{tpu_custom_call.1}
  #allocation0 [shape = 'u32[]', space=smem, size = 0x4, offset = 0x4, fixed_abs, tag = 'smem constant byte address 0x4 - core index']
  #allocation1 [shape = 'u32[72,128]{1,0:T(1,128)}', space=vmem, size = 0x9000, scoped, tag = 'internal scratch']
  #allocation2 [shape = 'f32[2,128]{1,0:T(2,128)}', space=vmem, size = 0x400, scoped, tag = 'scratch operand']
  #allocation3 [shape = 'f32[2,128]{1,0:T(2,128)}', space=vmem, size = 0x400, scoped, tag = 'scratch operand']
  %s0 = inlined_call_operand.vmem [shape: f32[2,2,32], index: 0, kind: input, shape index: {}]
  %s1 = inlined_call_operand.vmem [shape: f32[2,1,6,128], index: 1, kind: input, shape index: {}]
  %s2 = inlined_call_operand.vmem [shape: bf16[2,2,64,16], index: 2, kind: input, shape index: {}]
  %s3 = inlined_call_operand.hbm [shape: f32[2,4,256], index: 3, kind: output, shape index: {}]
  %s4 = sld [smem:[#allocation0]]
  $region65: #{tpu_custom_call.1} parent=0
    _
  %s6 = ssub.s32 1, %s4
  %s7 = scalar_select 0, %s6, %s4
  $region1: #{tpu_custom_call.1} parent=0
    #allocation4 [shape = 'u8[2048]{0}', space=smem, size = 0x800, scoped, tag = 'input window, operand 0, single buffered']
    #allocation5 [shape = 's32[2]{0}', space=sflag, size = 0x8, scoped, tag = 'scoped memory for tpu_custom_call.1']
    #allocation6 [shape = 's32[2]{0}', space=sflag, size = 0x8, scoped, tag = 'scoped memory for tpu_custom_call.1']
    #allocation7 [shape = 'u8[8192]{0}', space=vmem, size = 0x2000, scoped, tag = 'output window, operand 0']
    %8 = vsyncpa [#allocation6], 0
    %9 = vsyncpa [#allocation5], 0
    %s10 = scalar_lea.sflag [#allocation5], 1
    %11 = vsyncpa %s10, 0
    loop: start=0, step=1, limit=6
    $region2: #{tpu_custom_call.1} parent=1 // loop_pre_header
      _
    $region3: #{tpu_custom_call.1} parent=1 // loop_header
      %s13 = sphi 0, %s17
      %p14 = scmp.ge.s32.totalorder %s13, 6
      %s20 = sphi 0, %s39
      %s21 = sphi 0, %s35
      %s22 = sphi 0, %s31
      %s23 = sphi 0, %s20
      %s24 = sphi 0, %s21
      %s25 = sphi 0, %s22
      %s26 = sphi 0, %s23
      %s27 = sphi 0, %s24
      %s28 = sphi 0, %s25
      %s40 = sphi 0, %s40
      %s42 = sphi 0, %s40
      %s43 = sphi 0, %s42
      %s57 = sphi 0, %s43
      %s65 = sphi 0, %s67
      %s68 = sphi 0, %s65
      %s69 = sphi 0, %s68
      %s85 = sphi 0, %s69
      %s93 = sphi 0, %s95
      %s96 = sphi 0, %s93
      %s97 = sphi 0, %s96
      %s113 = sphi 0, %s97
      %s121 = sphi 0, %s123
      %s124 = sphi 0, %s121
      %s125 = sphi 0, %s124
      %s141 = sphi 0, %s125
    $region4: #{tpu_custom_call.1} parent=1 // loop_header_branch
      %16 = sbr.rel (%p14) target = $region8
    $region5: #{tpu_custom_call.1} parent=1 // loop_body
      %s18 = ssub.s32 %s13, 1
      %s19 = ssub.s32 %s13, 2
      %s29 = sadd.s32 1, %s22
      %p30 = scmp.ge.s32.totalorder %s29, 2
      %s31 = scalar_select %p30, 0, %s29
      %s32 = sadd.s32 1, %s21
      %s33 = scalar_select %p30, %s32, %s21
      %p34 = scmp.ge.s32.totalorder %s33, 1
      %s35 = scalar_select %p34, 0, %s33
      %s36 = sadd.s32 1, %s20
      %s37 = scalar_select %p34, %s36, %s20
      %p38 = scmp.ge.s32.totalorder %s37, 2
      %s39 = scalar_select %p38, 0, %s37
      %s41 = sadd.s32 %s40, 1
      %p44 = scmp.eq.s32.totalorder %s13, 3
      %p45 = scmp.ne.s32.totalorder %s40, %s42
      %p46 = scmp.eq.s32.totalorder %s13, 0
      %p47 = por %p45, %p46
      %p48 = scmp.ne.s32.totalorder %s40, %s42
      %p49 = scmp.eq.s32.totalorder %s18, 3
      %p50 = por %p48, %p49
      %p51 = scmp.ne.s32.totalorder %s42, %s43
      %p52 = scmp.eq.s32.totalorder %s18, 0
      %p53 = por %p51, %p52
      %p54 = scmp.ne.s32.totalorder %s42, %s43
      %p55 = scmp.eq.s32.totalorder %s19, 3
      %p56 = por %p54, %p55
      %p58 = scmp.ne.s32.totalorder %s43, %s57
      %p59 = scmp.eq.s32.totalorder %s19, 0
      %p60 = por %p58, %p59
      %s61 = ssub.s32 %s20, %s39
      %s62 = ssub.s32 %s21, %s35
      %s63 = sor.u32 %s61, %s62
      %p64 = scmp.eq.s32.totalorder %s63, 0
      %s66 = sadd.s32 %s65, 1
      %s67 = scalar_select %p64, %s65, %s66
      %p70 = pneg %p64
      %p71 = scmp.eq.s32.totalorder %s13, 3
      %p72 = por %p70, %p71
      %p73 = scmp.ne.s32.totalorder %s65, %s68
      %p74 = scmp.eq.s32.totalorder %s13, 0
      %p75 = por %p73, %p74
      %p76 = scmp.ne.s32.totalorder %s65, %s68
      %p77 = scmp.eq.s32.totalorder %s18, 3
      %p78 = por %p76, %p77
      %p79 = scmp.ne.s32.totalorder %s68, %s69
      %p80 = scmp.eq.s32.totalorder %s18, 0
      %p81 = por %p79, %p80
      %p82 = scmp.ne.s32.totalorder %s68, %s69
      %p83 = scmp.eq.s32.totalorder %s19, 3
      %p84 = por %p82, %p83
      %p86 = scmp.ne.s32.totalorder %s69, %s85
      %p87 = scmp.eq.s32.totalorder %s19, 0
      %p88 = por %p86, %p87
      %s89 = ssub.s32 %s20, %s39
      %s90 = ssub.s32 %s22, %s31
      %s91 = sor.u32 %s89, %s90
      %p92 = scmp.eq.s32.totalorder %s91, 0
      %s94 = sadd.s32 %s93, 1
      %s95 = scalar_select %p92, %s93, %s94
      %p98 = pneg %p92
      %p99 = scmp.eq.s32.totalorder %s13, 3
      %p100 = por %p98, %p99
      %p101 = scmp.ne.s32.totalorder %s93, %s96
      %p102 = scmp.eq.s32.totalorder %s13, 0
      %p103 = por %p101, %p102
      %p104 = scmp.ne.s32.totalorder %s93, %s96
      %p105 = scmp.eq.s32.totalorder %s18, 3
      %p106 = por %p104, %p105
      %p107 = scmp.ne.s32.totalorder %s96, %s97
      %p108 = scmp.eq.s32.totalorder %s18, 0
      %p109 = por %p107, %p108
      %p110 = scmp.ne.s32.totalorder %s96, %s97
      %p111 = scmp.eq.s32.totalorder %s19, 3
      %p112 = por %p110, %p111
      %p114 = scmp.ne.s32.totalorder %s97, %s113
      %p115 = scmp.eq.s32.totalorder %s19, 0
      %p116 = por %p114, %p115
      %s117 = ssub.s32 %s20, %s39
      %s118 = ssub.s32 %s21, %s35
      %s119 = sor.u32 %s117, %s118
      %p120 = scmp.eq.s32.totalorder %s119, 0
      %s122 = sadd.s32 %s121, 1
      %s123 = scalar_select %p120, %s121, %s122
      %p126 = pneg %p120
      %p127 = scmp.eq.s32.totalorder %s13, 3
      %p128 = por %p126, %p127
      %p129 = scmp.ne.s32.totalorder %s121, %s124
      %p130 = scmp.eq.s32.totalorder %s13, 0
      %p131 = por %p129, %p130
      %p132 = scmp.ne.s32.totalorder %s121, %s124
      %p133 = scmp.eq.s32.totalorder %s18, 3
      %p134 = por %p132, %p133
      %p135 = scmp.ne.s32.totalorder %s124, %s125
      %p136 = scmp.eq.s32.totalorder %s18, 0
      %p137 = por %p135, %p136
      %p138 = scmp.ne.s32.totalorder %s124, %s125
      %p139 = scmp.eq.s32.totalorder %s19, 3
      %p140 = por %p138, %p139
      %p142 = scmp.ne.s32.totalorder %s125, %s141
      %p143 = scmp.eq.s32.totalorder %s19, 0
      %p144 = por %p142, %p143
      %p145 = scmp.le.s32.totalorder 1, %s13
      %p146 = scmp.lt.s32.totalorder %s13, 5
      %p147 = pnand %p145, %p146
      %p148 = pneg %p147
      // Predicated region
      $region9: #{tpu_custom_call.1} parent=5 // pred_check
        _
      $region10: #{tpu_custom_call.1} parent=5 // pred_check_branch
        %150 = sbr.rel (%p147) target = $region12
      $region11: #{tpu_custom_call.1} parent=5 // pred_region
        %s151 = ssub.s32 %s13, 1
        // Predicated region
        $region13: #{tpu_custom_call.1} parent=11 // pred_check
          %p152 = pneg %p53
        $region14: #{tpu_custom_call.1} parent=11 // pred_check_branch
          %154 = sbr.rel (%p152) target = $region16
        $region15: #{tpu_custom_call.1} parent=11 // pred_region
          %156 = vsyncadd [#allocation6], 0
          %s157 = sshll.u32 %s0, 4
          %s158 = int_to_ptr.vmem [resolvable:$true] %s157
          %163 = dma.vmem_to_smem %s158, 64, [#allocation4], [#allocation6], 32, 32, 2
        $region16: #{tpu_custom_call.1} parent=11 // pred_fallthru
          _
      $region12: #{tpu_custom_call.1} parent=5 // pred_fallthru
        _
      %p164 = scmp.lt.s32.totalorder %s13, 4
      // Predicated region
      $region17: #{tpu_custom_call.1} parent=5 // pred_check
        %p165 = pneg %p164
      $region18: #{tpu_custom_call.1} parent=5 // pred_check_branch
        %167 = sbr.rel (%p165) target = $region20
      $region19: #{tpu_custom_call.1} parent=5 // pred_region
        // Predicated region
        $region21: #{tpu_custom_call.1} parent=19 // pred_check
          %p168 = pneg %p75
        $region22: #{tpu_custom_call.1} parent=19 // pred_check_branch
          %170 = sbr.rel (%p168) target = $region24
        $region23: #{tpu_custom_call.1} parent=19 // pred_region
          %p171 = scmp.lt.s32.totalorder %s20, 1
          %s172 = scalar_select %p171, %s20, 1
          %p173 = scmp.lt.s32.totalorder %s21, 0
          %s174 = scalar_select %p173, %s21, 0
          %s175 = sadd.s32 %s174, %s172
          %s176 = smul.addr %s175, 8
          %s177 = scalar_lea.vmem %s1, %s176
        $region24: #{tpu_custom_call.1} parent=19 // pred_fallthru
          _
        // Predicated region
        $region25: #{tpu_custom_call.1} parent=19 // pred_check
          %p178 = pneg %p103
        $region26: #{tpu_custom_call.1} parent=19 // pred_check_branch
          %180 = sbr.rel (%p178) target = $region28
        $region27: #{tpu_custom_call.1} parent=19 // pred_region
          %p181 = scmp.lt.s32.totalorder %s20, 1
          %s182 = scalar_select %p181, %s20, 1
          %p183 = scmp.lt.s32.totalorder %s22, 1
          %s184 = scalar_select %p183, %s22, 1
          %s185 = smul.addr %s184, 8
          %s186 = smul.addr %s182, 16
          %s187 = sadd.s32 %s185, %s186
          %s188 = smul.addr %s187, 4
          %s189 = scalar_lea.vmem %s2, %s188
        $region28: #{tpu_custom_call.1} parent=19 // pred_fallthru
          _
      $region20: #{tpu_custom_call.1} parent=5 // pred_fallthru
        _
      %p190 = scmp.le.s32.totalorder 1, %s13
      %p191 = scmp.lt.s32.totalorder %s13, 5
      %p192 = pnand %p190, %p191
      %p193 = pneg %p192
      // Predicated region
      $region29: #{tpu_custom_call.1} parent=5 // pred_check
        _
      $region30: #{tpu_custom_call.1} parent=5 // pred_check_branch
        %195 = sbr.rel (%p192) target = $region32
      $region31: #{tpu_custom_call.1} parent=5 // pred_region
        %s196 = ssub.s32 %s13, 1
        // Predicated region
        $region33: #{tpu_custom_call.1} parent=31 // pred_check
          %p197 = pneg %p53
        $region34: #{tpu_custom_call.1} parent=31 // pred_check_branch
          %199 = sbr.rel (%p197) target = $region36
        $region35: #{tpu_custom_call.1} parent=31 // pred_region
          %201 = dma.done [#allocation6], 64
        $region36: #{tpu_custom_call.1} parent=31 // pred_fallthru
          _
        %202 = sfence
        %p203 = pneg %p53
        %p204 = pneg %p50
        %p205 = scmp.lt.s32.totalorder %s23, 1
        %s206 = scalar_select %p205, %s23, 1
        %p207 = scmp.lt.s32.totalorder %s24, 0
        %s208 = scalar_select %p207, %s24, 0
        %s209 = sadd.s32 %s208, %s206
        %s210 = smul.addr %s209, 8
        %s211 = scalar_lea.vmem %s1, %s210
        %p212 = pneg %p81
        %p213 = pneg %p78
        %p214 = scmp.lt.s32.totalorder %s23, 1
        %s215 = scalar_select %p214, %s23, 1
        %p216 = scmp.lt.s32.totalorder %s25, 1
        %s217 = scalar_select %p216, %s25, 1
        %s218 = smul.addr %s217, 8
        %s219 = smul.addr %s215, 16
        %s220 = sadd.s32 %s218, %s219
        %s221 = smul.addr %s220, 4
        %s222 = scalar_lea.vmem %s2, %s221
        %p223 = pneg %p109
        %p224 = pneg %p106
        %p225 = pneg %p137
        %p226 = pneg %p134
        %s227 = sand.u32 %s124, 1
        %s228 = scalar_lea.sflag [#allocation5], %s227
        %s229 = sand.u32 %s124, 1
        %s230 = smul.addr %s229, 8
        %s231 = scalar_lea.vmem [#allocation7], %s230
        %p232 = scmp.lt.s32.totalorder %s23, 1
        %s233 = scalar_select %p232, %s23, 1
        %p234 = scmp.lt.s32.totalorder %s24, 0
        %s235 = scalar_select %p234, %s24, 0
        %s236 = sadd.s32 %s235, %s233
        %s237 = smul.addr %s236, 8
        %s238 = scalar_lea.vmem %s1, %s237
        %p239 = scmp.lt.s32.totalorder %s23, 1
        %s240 = scalar_select %p239, %s23, 1
        %p241 = scmp.lt.s32.totalorder %s25, 1
        %s242 = scalar_select %p241, %s25, 1
        %s243 = smul.addr %s242, 8
        %s244 = smul.addr %s240, 16
        %s245 = sadd.s32 %s243, %s244
        %s246 = smul.addr %s245, 4
        %s247 = scalar_lea.vmem %s2, %s246
        %s248 = smul.u32 2, %s24
        %p250 = scmp.eq.s32.totalorder %s25, 0
        // Predicated region
        $region37: #{tpu_custom_call.1} parent=31 // pred_check
          %p251 = pneg %p250
        $region38: #{tpu_custom_call.1} parent=31 // pred_check_branch
          %253 = sbr.rel (%p251) target = $region40
        $region39: #{tpu_custom_call.1} parent=31 // pred_region
          %254 = vst [vmem:[%s231] sm:$0xff] -inf
        $region40: #{tpu_custom_call.1} parent=31 // pred_fallthru
          _
        %s255 = smul.u32 %s23, 2
        %s256 = sadd.s32 %s25, %s255
        %s257 = smul.u32 %s256, 128
        %s258 = sadd.s32 %s257, 29
        %s259 = sld [smem:[#allocation4 + %s258]]
        %p260 = scmp.gt.f32.partialorder %s259, 0.5
        // Predicated region
        $region41: #{tpu_custom_call.1} parent=31 // pred_check
          %p261 = pneg %p260
        $region42: #{tpu_custom_call.1} parent=31 // pred_check_branch
          %263 = sbr.rel (%p261) target = $region44
        $region43: #{tpu_custom_call.1} parent=31 // pred_region
          %s264 = sld [smem:[#allocation4 + %s257]]
          %s265 = sadd.s32 %s257, 1
          %s266 = sld [smem:[#allocation4 + %s265]]
          %s267 = sadd.s32 %s257, 2
          %s268 = sld [smem:[#allocation4 + %s267]]
          %s269 = sadd.s32 %s257, 3
          %s270 = sld [smem:[#allocation4 + %s269]]
          %s271 = sadd.s32 %s257, 4
          %s272 = sld [smem:[#allocation4 + %s271]]
          %s273 = sadd.s32 %s257, 5
          %s274 = sld [smem:[#allocation4 + %s273]]
          %s275 = sadd.s32 %s257, 6
          %s276 = sld [smem:[#allocation4 + %s275]]
          %s277 = sadd.s32 %s257, 7
          %s278 = sld [smem:[#allocation4 + %s277]]
          %s279 = sadd.s32 %s257, 8
          %s280 = sld [smem:[#allocation4 + %s279]]
          %s281 = sadd.s32 %s257, 9
          %s282 = sld [smem:[#allocation4 + %s281]]
          %s283 = sadd.s32 %s257, 10
          %s284 = sld [smem:[#allocation4 + %s283]]
          %s285 = sadd.s32 %s257, 11
          %s286 = sld [smem:[#allocation4 + %s285]]
          %s287 = sadd.s32 %s257, 12
          %s288 = sld [smem:[#allocation4 + %s287]]
          %s289 = sadd.s32 %s257, 13
          %s290 = sld [smem:[#allocation4 + %s289]]
          %s291 = sadd.s32 %s257, 14
          %s292 = sld [smem:[#allocation4 + %s291]]
          %s293 = sadd.s32 %s257, 15
          %s294 = sld [smem:[#allocation4 + %s293]]
          %s295 = sadd.s32 %s257, 16
          %s296 = sld [smem:[#allocation4 + %s295]]
          %s297 = sadd.s32 %s257, 17
          %s298 = sld [smem:[#allocation4 + %s297]]
          %s299 = sadd.s32 %s257, 18
          %s300 = sld [smem:[#allocation4 + %s299]]
          %s301 = sadd.s32 %s257, 19
          %s302 = sld [smem:[#allocation4 + %s301]]
          %s303 = sadd.s32 %s257, 20
          %s304 = sld [smem:[#allocation4 + %s303]]
          %s305 = sadd.s32 %s257, 21
          %s306 = sld [smem:[#allocation4 + %s305]]
          %s307 = sadd.s32 %s257, 22
          %s308 = sld [smem:[#allocation4 + %s307]]
          %s309 = sadd.s32 %s257, 23
          %s310 = sld [smem:[#allocation4 + %s309]]
          %s311 = sadd.s32 %s257, 24
          %s312 = sld [smem:[#allocation4 + %s311]]
          %s313 = sadd.s32 %s257, 25
          %s314 = sld [smem:[#allocation4 + %s313]]
          %s315 = sadd.s32 %s257, 26
          %s316 = sld [smem:[#allocation4 + %s315]]
          %s317 = sadd.s32 %s257, 27
          %s318 = sld [smem:[#allocation4 + %s317]]
          %s319 = sadd.s32 %s257, 28
          %s320 = sld [smem:[#allocation4 + %s319]]
          %v321 = vstv %s288
          %v322 = vrcp.pop %v321
          %v323 = vmul.f32 %v321, %v322
          %v324 = vsub.f32 1.0, %v323
          %v325 = vmul.f32 %v322, %v324
          %v326 = vadd.f32 %v322, %v325
          %vm327 = vweird.f32 %v321
          %vm328 = vweird.f32 %v322
          %vm329 = vmor %vm327, %vm328
          %v330 = vsel %vm329, %v322, %v326
          %v331 = vand.u32 2147483647, %v321
          %vm332 = vcmp.eq.f32.partialorder %v331, 8.507059e+37
          %v333 = vand.u32 %v321, 2147483648
          %v334 = vor.u32 1.1754944e-38, %v333
          %v335 = vsel %vm332, %v334, %v330
          %s336 = vtos %v335
          %v337 = vstv %s290
          %v338 = vrcp.pop %v337
          %v339 = vmul.f32 %v337, %v338
          %v340 = vsub.f32 1.0, %v339
          %v341 = vmul.f32 %v338, %v340
          %v342 = vadd.f32 %v338, %v341
          %vm343 = vweird.f32 %v337
          %vm344 = vweird.f32 %v338
          %vm345 = vmor %vm343, %vm344
          %v346 = vsel %vm345, %v338, %v342
          %v347 = vand.u32 2147483647, %v337
          %vm348 = vcmp.eq.f32.partialorder %v347, 8.507059e+37
          %v349 = vand.u32 %v337, 2147483648
          %v350 = vor.u32 1.1754944e-38, %v349
          %v351 = vsel %vm348, %v350, %v346
          %s352 = vtos %v351
          %v353 = vld [vmem:[%s238] sm:$0x3]
          %v354 = vld [vmem:[%s238 + $0x2] sm:$0x3]
          %v355 = vld [vmem:[%s238 + $0x4] sm:$0x3]
          %v356 = vstv %s264
          %v357 = vmul.f32 %v356, %v353
          %v358 = vstv %s266
          %v359 = vmul.f32 %v358, %v354
          %v360 = vadd.f32 %v357, %v359
          %v361 = vstv %s268
          %v362 = vmul.f32 %v361, %v355
          %v363 = vadd.f32 %v360, %v362
          %v364 = vstv %s270
          %v365 = vadd.f32 %v363, %v364
          %v366 = vstv %s272
          %v367 = vmul.f32 %v366, %v353
          %v368 = vstv %s274
          %v369 = vmul.f32 %v368, %v354
          %v370 = vadd.f32 %v367, %v369
          %v371 = vstv %s276
          %v372 = vmul.f32 %v371, %v355
          %v373 = vadd.f32 %v370, %v372
          %v374 = vstv %s278
          %v375 = vadd.f32 %v373, %v374
          %v376 = vstv %s280
          %v377 = vmul.f32 %v376, %v353
          %v378 = vstv %s282
          %v379 = vmul.f32 %v378, %v354
          %v380 = vadd.f32 %v377, %v379
          %v381 = vstv %s284
          %v382 = vmul.f32 %v381, %v355
          %v383 = vadd.f32 %v380, %v382
          %v384 = vstv %s286
          %v385 = vadd.f32 %v383, %v384
          %vm386 = vcmp.gt.f32.partialorder %v385, 0.0
          %v387 = vsel %vm386, 1, 0
          %v388 = vcvt.s32.f32 %v387
          %v389 = vsel %vm386, %v385, 1.0
          %v390 = vrcp.pop %v389
          %v391 = vmul.f32 %v389, %v390
          %v392 = vsub.f32 2.0, %v391
          %v393 = vmul.f32 %v390, %v392
          %v394 = vmul.f32 %v365, %v388
          %v395 = vmul.f32 %v394, %v393
          %v396 = vmul.f32 %v375, %v388
          %v397 = vmul.f32 %v396, %v393
          %v398 = vstv %s292
          %v399 = vsub.f32 %v395, %v398
          %v400 = vstv %s336
          %v401 = vmul.f32 %v399, %v400
          %v402 = vstv %s294
          %v403 = vsub.f32 %v397, %v402
          %v404 = vstv %s352
          %v405 = vmul.f32 %v403, %v404
          %v406 = vmul.f32 %v401, %v401
          %v407 = vmul.f32 %v405, %v405
          %v408 = vadd.f32 %v406, %v407
          %p409 = scmp.gt.f32.partialorder %s308, 0.5
          // Predicated region
          $region45: #{tpu_custom_call.1} parent=43 // pred_check
            %p410 = pneg %p409
          $region46: #{tpu_custom_call.1} parent=43 // pred_check_branch
            %412 = sbr.rel (%p410) target = $region48
          $region47: #{tpu_custom_call.1} parent=43 // pred_region
            %v413 = vrsqrt.pop %v408
            %v414 = vmul.f32 %v413, %v408
            %v415 = vmul.f32 %v414, %v413
            %v416 = vmul.f32 0.5, %v415
            %v417 = vsub.f32 1.5, %v416
            %v418 = vmul.f32 %v413, %v417
            %v419 = vmul.f32 %v408, %v418
            %vm420 = vcmp.eq.f32.partialorder %v408, inf
            %v421 = vsel %vm420, %v408, %v419
            %vm422 = vcmp.eq.f32.partialorder %v408, 0.0
            %v423 = vand.u32 %v408, 2147483648
            %v424 = vsel %vm422, %v423, %v421
            %vm425 = vcmp.gt.f32.partialorder %v424, 2.4142137
            %vm426 = vcmp.gt.f32.partialorder %v424, 0.41421357
            %vm427 = vmxor %vm425, 1
            %vm428 = vmand %vm426, %vm427
            %v429 = vsel %vm428, 0.7853982, 0.0
            %v430 = vsel %vm425, 1.5707964, %v429
            %v431 = vmax.f32 %v424, 1e-30
            %v432 = vrcp.pop %v431
            %v433 = vmul.f32 %v431, %v432
            %v434 = vsub.f32 2.0, %v433
            %v435 = vmul.f32 %v432, %v434
            %v436 = vsub.f32 0.0, %v435
            %v437 = vsub.f32 %v424, 1.0
            %v438 = vadd.f32 %v424, 1.0
            %v439 = vrcp.pop %v438
            %v440 = vmul.f32 %v438, %v439
            %v441 = vsub.f32 2.0, %v440
            %v442 = vmul.f32 %v439, %v441
            %v443 = vmul.f32 %v437, %v442
            %v444 = vsel %vm428, %v443, %v424
            %v445 = vsel %vm425, %v436, %v444
            %v446 = vmul.f32 %v445, %v445
            %v447 = vmul.f32 %v446, 0.080537446
            %v448 = vsub.f32 %v447, 0.13877685
            %v449 = vmul.f32 %v448, %v446
            %v450 = vadd.f32 %v449, 0.19977711
            %v451 = vmul.f32 %v450, %v446
            %v452 = vsub.f32 %v451, 0.3333295
            %v453 = vmul.f32 %v452, %v446
            %v454 = vmul.f32 %v453, %v445
            %v455 = vadd.f32 %v454, %v445
            %v456 = vadd.f32 %v430, %v455
            %v457 = vmul.f32 %v456, %v456
            %v458 = vstv %s296
            %v459 = vmul.f32 %v458, %v457
            %v460 = vadd.f32 %v459, 1.0
            %v461 = vstv %s298
            %v462 = vmul.f32 %v461, %v457
            %v463 = vmul.f32 %v462, %v457
            %v464 = vadd.f32 %v460, %v463
            %v465 = vstv %s300
            %v466 = vmul.f32 %v465, %v457
            %v467 = vmul.f32 %v466, %v457
            %v468 = vmul.f32 %v467, %v457
            %v469 = vadd.f32 %v464, %v468
            %v470 = vstv %s306
            %v471 = vmul.f32 %v470, %v457
            %v472 = vmul.f32 %v471, %v457
            %v473 = vmul.f32 %v472, %v457
            %v474 = vmul.f32 %v473, %v457
            %v475 = vadd.f32 %v469, %v474
            %v476 = vmul.f32 %v456, %v475
            %v477 = vmax.f32 %v424, 1e-20
            %v478 = vrcp.pop %v477
            %v479 = vmul.f32 %v477, %v478
            %v480 = vsub.f32 2.0, %v479
            %v481 = vmul.f32 %v478, %v480
            %v482 = vmul.f32 %v476, %v481
            %v483 = vmul.f32 %v401, %v482
            %484 = vst [vmem:[#allocation2] sm:$0x3] %v483
            %v485 = vmul.f32 %v405, %v482
            %486 = vst [vmem:[#allocation3] sm:$0x3] %v485
          $region48: #{tpu_custom_call.1} parent=43 // pred_fallthru
            _
          %p487 = scmp.le.f32.partialorder %s308, 0.5
          // Predicated region
          $region49: #{tpu_custom_call.1} parent=43 // pred_check
            %p488 = pneg %p487
          $region50: #{tpu_custom_call.1} parent=43 // pred_check_branch
            %490 = sbr.rel (%p488) target = $region52
          $region51: #{tpu_custom_call.1} parent=43 // pred_region
            %v491 = vstv %s296
            %v492 = vmul.f32 %v491, %v408
            %v493 = vadd.f32 %v492, 1.0
            %v494 = vstv %s298
            %v495 = vmul.f32 %v494, %v408
            %v496 = vmul.f32 %v495, %v408
            %v497 = vadd.f32 %v493, %v496
            %v498 = vstv %s300
            %v499 = vmul.f32 %v498, %v408
            %v500 = vmul.f32 %v499, %v408
            %v501 = vmul.f32 %v500, %v408
            %v502 = vadd.f32 %v497, %v501
            %v503 = vmul.f32 %v401, %v502
            %s504 = smul.f32 %s302, 2.0
            %v505 = vstv %s504
            %v506 = vmul.f32 %v505, %v401
            %v507 = vmul.f32 %v506, %v405
            %v508 = vmul.f32 %v401, 2.0
            %v509 = vmul.f32 %v508, %v401
            %v510 = vadd.f32 %v408, %v509
            %v511 = vstv %s304
            %v512 = vmul.f32 %v511, %v510
            %v513 = vadd.f32 %v507, %v512
            %v514 = vadd.f32 %v503, %v513
            %515 = vst [vmem:[#allocation2] sm:$0x3] %v514
            %v516 = vmul.f32 %v405, %v502
            %v517 = vmul.f32 %v405, 2.0
            %v518 = vmul.f32 %v517, %v405
            %v519 = vadd.f32 %v408, %v518
            %v520 = vstv %s302
            %v521 = vmul.f32 %v520, %v519
            %s522 = smul.f32 %s304, 2.0
            %v523 = vstv %s522
            %v524 = vmul.f32 %v523, %v401
            %v525 = vmul.f32 %v524, %v405
            %v526 = vadd.f32 %v521, %v525
            %v527 = vadd.f32 %v516, %v526
            %528 = vst [vmem:[#allocation3] sm:$0x3] %v527
          $region52: #{tpu_custom_call.1} parent=43 // pred_fallthru
            _
          %v529 = vld [vmem:[#allocation2] sm:$0x3]
          %v530 = vstv %s288
          %v531 = vmul.f32 %v529, %v530
          %v532 = vadd.f32 %v531, %v398
          %v533 = vmul.f32 %v532, %v388
          %v534 = vld [vmem:[#allocation3] sm:$0x3]
          %v535 = vstv %s290
          %v536 = vmul.f32 %v534, %v535
          %v537 = vadd.f32 %v536, %v402
          %v538 = vmul.f32 %v537, %v388
          %v539 = vstv %s310
          %v540 = vmul.f32 %v539, %v533
          %v541 = vstv %s312
          %v542 = vmul.f32 %v541, %v538
          %v543 = vadd.f32 %v540, %v542
          %v544 = vstv %s318
          %v545 = vadd.f32 %v543, %v544
          %v546 = vstv %s314
          %v547 = vmul.f32 %v546, %v533
          %v548 = vstv %s316
          %v549 = vmul.f32 %v548, %v538
          %v550 = vadd.f32 %v547, %v549
          %v551 = vstv %s320
          %v552 = vadd.f32 %v550, %v551
          %v553 = vcvt.f32.s32.to.zero.pseudo %v545
          %v554 = vcvt.f32.s32.to.zero.pseudo %v552
          %vm555 = vcmp.gt.s32.totalorder %v553, 0
          %vm556 = vcmp.lt.s32.totalorder %v553, 16
          %vm557 = vmand %vm555, %vm556
          %vm558 = vcmp.gt.s32.totalorder %v554, 0
          %vm559 = vmand %vm557, %vm558
          %vm560 = vcmp.lt.s32.totalorder %v554, 16
          %vm561 = vmand %vm559, %vm560
          %v562 = vsel %vm561, %v553, 4294967295
          %v563 = vld [vmem:[%s247] sm:$0xf]
          %v564 = vld [vmem:[%s247 + $0x4] sm:$0xf]
          %v565 = vld [vmem:[%s247 + $0x8] sm:$0xf]
          %v566 = vld [vmem:[%s247 + $0xc] sm:$0xf]
          %v567 = vld [vmem:[%s247 + $0x10] sm:$0xf]
          %v568 = vld [vmem:[%s247 + $0x14] sm:$0xf]
          %v569 = vld [vmem:[%s247 + $0x18] sm:$0xf]
          %v570 = vld [vmem:[%s247 + $0x1c] sm:$0xf]
          %v571 = vlaneseq
          %v572 = vshrl.u32 %v571, 7
          %v573 = vadd.s32 %v572, 8
          %v574 = vperm.slane %v562, 0
          %vm575 = vcmp.eq.s32.totalorder %v572, %v574
          %vm576 = vcmp.eq.s32.totalorder %v573, %v574
          %v577 = vsel %vm575, 1, 0
          %v578 = vsel %vm576, 1, 0
          %v579 = vcvt.s32.f32 %v577
          %v580 = vcvt.s32.f32 %v578
          %v581 = vpack.c.bf16 %v580, %v579
          %v590 = vunpack.c.l.b16 %v563
          %v591 = vunpack.c.l.b16 %v564
          %v592 = vunpack.c.l.b16 %v565
          %v593 = vunpack.c.l.b16 %v566
          %v594 = vunpack.c.l.b16 %v567
          %v595 = vunpack.c.l.b16 %v568
          %v596 = vunpack.c.l.b16 %v569
          %v597 = vunpack.c.l.b16 %v570
          %v598 = vpack.c.b16 %v591, %v590
          %v599 = vpack.c.b16 %v593, %v592
          %v600 = vpack.c.b16 %v595, %v594
          %v601 = vpack.c.b16 %v597, %v596
          %vm602 = vcmask 130048
          %v604 = vsel %vm602, %v598, 0
          %v607 = vsel %vm602, %v599, 0
          %v610 = vsel %vm602, %v600, 0
          %v613 = vsel %vm602, %v601, 0
          %615 = vmatpush.bf16.msra.mxu0 0
          %616 = vmatpush.bf16.msra.mxu0 0
          %617 = vmatpush.bf16.msra.mxu0 0
          %618 = vmatpush.bf16.msra.mxu0 0
          %619 = vmatpush.bf16.msra.mxu0 0
          %620 = vmatpush.bf16.msra.mxu0 0
          %621 = vmatpush.bf16.msra.mxu0 0
          %622 = vmatpush.bf16.msra.mxu0 %v581
          %623 = vmatmul.bf16.gmra.mxu0 %v604
          %v624 = vpop.f32.mrf.mxu0
          %v625 = vadd.f32 0.0, %v624
          %v626 = vpop.f32.mrf.mxu0
          %v627 = vadd.f32 0.0, %v626
          %628 = vmatmul.bf16.gmra.mxu0 %v607
          %v629 = vpop.f32.mrf.mxu0
          %v630 = vadd.f32 0.0, %v629
          %v631 = vpop.f32.mrf.mxu0
          %v632 = vadd.f32 0.0, %v631
          %633 = vmatmul.bf16.gmra.mxu0 %v610
          %v634 = vpop.f32.mrf.mxu0
          %v635 = vadd.f32 0.0, %v634
          %v636 = vpop.f32.mrf.mxu0
          %v637 = vadd.f32 0.0, %v636
          %638 = vmatmul.bf16.gmra.mxu0 %v613
          %v639 = vpop.f32.mrf.mxu0
          %v640 = vadd.f32 0.0, %v639
          %v641 = vpop.f32.mrf.mxu0
          %v642 = vadd.f32 0.0, %v641
          %643 = vdwg.mxu0
          %v644 = vperm.slane %v554, 0
          %vm645 = vcmp.eq.s32.totalorder %v572, %v644
          %vm646 = vcmp.eq.s32.totalorder %v573, %v644
          %v647 = vsel %vm645, 1, 0
          %v648 = vsel %vm646, 1, 0
          %v649 = vcvt.s32.f32 %v647
          %v650 = vcvt.s32.f32 %v648
          %v651 = vmul.f32 %v625, %v649
          %v652 = vmul.f32 %v627, %v650
          %v653 = vmul.f32 %v630, %v649
          %v654 = vmul.f32 %v632, %v650
          %v655 = vmul.f32 %v635, %v649
          %v656 = vmul.f32 %v637, %v650
          %v657 = vmul.f32 %v640, %v649
          %v658 = vmul.f32 %v642, %v650
          %v659 = vadd.f32 %v651, %v652
          %v660 = vrot.slane %v659, 4
          %v661 = vadd.f32 %v659, %v660
          %v662 = vrot.slane %v661, 2
          %v663 = vadd.f32 %v661, %v662
          %v664 = vrot.slane %v663, 1
          %v665 = vadd.f32 %v663, %v664
          %v666 = vadd.f32 %v653, %v654
          %v667 = vrot.slane %v666, 4
          %v668 = vadd.f32 %v666, %v667
          %v669 = vrot.slane %v668, 2
          %v670 = vadd.f32 %v668, %v669
          %v671 = vrot.slane %v670, 1
          %v672 = vadd.f32 %v670, %v671
          %v673 = vadd.f32 %v655, %v656
          %v674 = vrot.slane %v673, 4
          %v675 = vadd.f32 %v673, %v674
          %v676 = vrot.slane %v675, 2
          %v677 = vadd.f32 %v675, %v676
          %v678 = vrot.slane %v677, 1
          %v679 = vadd.f32 %v677, %v678
          %v680 = vadd.f32 %v657, %v658
          %v681 = vrot.slane %v680, 4
          %v682 = vadd.f32 %v680, %v681
          %v683 = vrot.slane %v682, 2
          %v684 = vadd.f32 %v682, %v683
          %v685 = vrot.slane %v684, 1
          %v686 = vadd.f32 %v684, %v685
          %v687 = vld [vmem:[%s231] sm:$0xf]
          %v692 = vrot.slane %v672, 7
          %vm693 = vcmask 1041409
          %v694 = vsel %vm693, %v692, %v665
          %vm695 = vcmask 1045509
          %v696 = vsel %vm695, %v692, %v694
          %v697 = vrot.slane %v679, 6
          %vm698 = vcmask 1042434
          %v699 = vsel %vm698, %v697, %v696
          %vm700 = vcmask 1046534
          %v701 = vsel %vm700, %v697, %v699
          %v702 = vrot.slane %v686, 5
          %vm703 = vcmask 1043459
          %v704 = vsel %vm703, %v702, %v701
          %vm705 = vcmask 1047559
          %v706 = vsel %vm705, %v702, %v704
          %v708 = vmax.f32 %v687, %v706
          %709 = vst [vmem:[%s231] sm:$0xf] %v708
          %v710 = vperm.slane %v562, 1
          %vm711 = vcmp.eq.s32.totalorder %v572, %v710
          %vm712 = vcmp.eq.s32.totalorder %v573, %v710
          %v713 = vsel %vm711, 1, 0
          %v714 = vsel %vm712, 1, 0
          %v715 = vcvt.s32.f32 %v713
          %v716 = vcvt.s32.f32 %v714
          %v717 = vpack.c.bf16 %v716, %v715
          %718 = vmatpush.bf16.msra.mxu0 0
          %719 = vmatpush.bf16.msra.mxu0 0
          %720 = vmatpush.bf16.msra.mxu0 0
          %721 = vmatpush.bf16.msra.mxu0 0
          %722 = vmatpush.bf16.msra.mxu0 0
          %723 = vmatpush.bf16.msra.mxu0 0
          %724 = vmatpush.bf16.msra.mxu0 0
          %725 = vmatpush.bf16.msra.mxu0 %v717
          %726 = vmatmul.bf16.gmra.mxu0 %v604
          %v727 = vpop.f32.mrf.mxu0
          %v728 = vadd.f32 0.0, %v727
          %v729 = vpop.f32.mrf.mxu0
          %v730 = vadd.f32 0.0, %v729
          %731 = vmatmul.bf16.gmra.mxu0 %v607
          %v732 = vpop.f32.mrf.mxu0
          %v733 = vadd.f32 0.0, %v732
          %v734 = vpop.f32.mrf.mxu0
          %v735 = vadd.f32 0.0, %v734
          %736 = vmatmul.bf16.gmra.mxu0 %v610
          %v737 = vpop.f32.mrf.mxu0
          %v738 = vadd.f32 0.0, %v737
          %v739 = vpop.f32.mrf.mxu0
          %v740 = vadd.f32 0.0, %v739
          %741 = vmatmul.bf16.gmra.mxu0 %v613
          %v742 = vpop.f32.mrf.mxu0
          %v743 = vadd.f32 0.0, %v742
          %v744 = vpop.f32.mrf.mxu0
          %v745 = vadd.f32 0.0, %v744
          %746 = vdwg.mxu0
          %v747 = vperm.slane %v554, 1
          %vm748 = vcmp.eq.s32.totalorder %v572, %v747
          %vm749 = vcmp.eq.s32.totalorder %v573, %v747
          %v750 = vsel %vm748, 1, 0
          %v751 = vsel %vm749, 1, 0
          %v752 = vcvt.s32.f32 %v750
          %v753 = vcvt.s32.f32 %v751
          %v754 = vmul.f32 %v728, %v752
          %v755 = vmul.f32 %v730, %v753
          %v756 = vmul.f32 %v733, %v752
          %v757 = vmul.f32 %v735, %v753
          %v758 = vmul.f32 %v738, %v752
          %v759 = vmul.f32 %v740, %v753
          %v760 = vmul.f32 %v743, %v752
          %v761 = vmul.f32 %v745, %v753
          %v762 = vadd.f32 %v754, %v755
          %v763 = vrot.slane %v762, 4
          %v764 = vadd.f32 %v762, %v763
          %v765 = vrot.slane %v764, 2
          %v766 = vadd.f32 %v764, %v765
          %v767 = vrot.slane %v766, 1
          %v768 = vadd.f32 %v766, %v767
          %v769 = vadd.f32 %v756, %v757
          %v770 = vrot.slane %v769, 4
          %v771 = vadd.f32 %v769, %v770
          %v772 = vrot.slane %v771, 2
          %v773 = vadd.f32 %v771, %v772
          %v774 = vrot.slane %v773, 1
          %v775 = vadd.f32 %v773, %v774
          %v776 = vadd.f32 %v758, %v759
          %v777 = vrot.slane %v776, 4
          %v778 = vadd.f32 %v776, %v777
          %v779 = vrot.slane %v778, 2
          %v780 = vadd.f32 %v778, %v779
          %v781 = vrot.slane %v780, 1
          %v782 = vadd.f32 %v780, %v781
          %v783 = vadd.f32 %v760, %v761
          %v784 = vrot.slane %v783, 4
          %v785 = vadd.f32 %v783, %v784
          %v786 = vrot.slane %v785, 2
          %v787 = vadd.f32 %v785, %v786
          %v788 = vrot.slane %v787, 1
          %v789 = vadd.f32 %v787, %v788
          %v790 = vld [vmem:[%s231 + $0x4] sm:$0xf]
          %v795 = vrot.slane %v775, 7
          %v796 = vsel %vm693, %v795, %v768
          %v797 = vsel %vm695, %v795, %v796
          %v798 = vrot.slane %v782, 6
          %v799 = vsel %vm698, %v798, %v797
          %v800 = vsel %vm700, %v798, %v799
          %v801 = vrot.slane %v789, 5
          %v802 = vsel %vm703, %v801, %v800
          %v803 = vsel %vm705, %v801, %v802
          %v805 = vmax.f32 %v790, %v803
          %806 = vst [vmem:[%s231 + $0x4] sm:$0xf] %v805
        $region44: #{tpu_custom_call.1} parent=31 // pred_fallthru
          _
        %s807 = sand.u32 %s124, 1
        %s808 = scalar_lea.sflag [#allocation5], %s807
        %s809 = sand.u32 %s124, 1
        %s810 = smul.addr %s809, 8
        %s811 = scalar_lea.vmem [#allocation7], %s810
        // Predicated region
        $region53: #{tpu_custom_call.1} parent=31 // pred_check
          %p812 = pneg %p134
        $region54: #{tpu_custom_call.1} parent=31 // pred_check_branch
          %814 = sbr.rel (%p812) target = $region56
        $region55: #{tpu_custom_call.1} parent=31 // pred_region
          %s815 = smul.u32 2, %s24
          %817 = vsyncadd %s808, 0
          %s818 = smul.addr %s23, 2
          %s819 = sadd.s32 %s815, %s818
          %s820 = smul.addr %s819, 4
          %s821 = scalar_lea.hbm %s3, %s820
          %s823 = sshll.u32 %s811, 4
          %s824 = int_to_ptr.vmem [resolvable:$true] %s823
          %s825 = sshll.u32 %s821, 4
          %s826 = int_to_ptr.hbm [resolvable:$true] %s825
          %828 = dma.vmem_to_hbm [thread:$0]  %s824, 128, %s826, %s808
        $region56: #{tpu_custom_call.1} parent=31 // pred_fallthru
          _
      $region32: #{tpu_custom_call.1} parent=5 // pred_fallthru
        _
      %p829 = scmp.le.s32.totalorder 2, %s13
      // Predicated region
      $region57: #{tpu_custom_call.1} parent=5 // pred_check
        %p830 = pneg %p829
      $region58: #{tpu_custom_call.1} parent=5 // pred_check_branch
        %832 = sbr.rel (%p830) target = $region60
      $region59: #{tpu_custom_call.1} parent=5 // pred_region
        %s833 = ssub.s32 %s13, 2
        // Predicated region
        $region61: #{tpu_custom_call.1} parent=59 // pred_check
          %p834 = pneg %p140
        $region62: #{tpu_custom_call.1} parent=59 // pred_check_branch
          %836 = sbr.rel (%p834) target = $region64
        $region63: #{tpu_custom_call.1} parent=59 // pred_region
          %s837 = sand.u32 %s125, 1
          %s838 = scalar_lea.sflag [#allocation5], %s837
          %s839 = sand.u32 %s125, 1
          %s840 = smul.addr %s839, 8
          %s841 = scalar_lea.vmem [#allocation7], %s840
          %843 = dma.done %s838, 128
        $region64: #{tpu_custom_call.1} parent=59 // pred_fallthru
          _
      $region60: #{tpu_custom_call.1} parent=5 // pred_fallthru
        _
    $region6: #{tpu_custom_call.1} parent=1 // loop_footer
      %s17 = sadd.s32 1, %s13
    $region7: #{tpu_custom_call.1} parent=1 // loop_footer_branch
      %12 = sbr.rel target = $region3
    $region8: #{tpu_custom_call.1} parent=1 // loop_exit
      _
    %844 = vsyncpa [#allocation5], 1
    %s845 = scalar_lea.sflag [#allocation5], 1
    %846 = vsyncpa %s845, 1
    %847 = vsyncpa [#allocation6], 1
    %s848 = scalar_lea.sflag [#allocation6], 1
    %849 = vsyncpa %s848, 1

</llo_original>
